<compile_context>
chip_gen: v5e
topology: v5e:2x2
jax: 0.10.0
libtpu: 0.0.40
codegen_flags: <defaults>
</compile_context>

<pallas_src>
import numpy as np
import jax
import jax.numpy as jnp
from jax import lax
from jax.experimental import pallas as pl
from jax.experimental.pallas import tpu as pltpu

H = 128           # dim_hidden   (NeuroSAT asserts 128)
NUM_ROUNDS = 26   # num_rounds   (NeuroSAT asserts 26)
NL_PAD = 16       # padded number of literal nodes (true count rounded to bf16 sublane tile)
NC_PAD = 16       # padded number of clause nodes
G_PAD = 8         # padded number of graphs in the batch


# ----------------------------- kernel helpers --------------------------------
def _mlp3(x_b, w1_ref, b1_ref, w2_ref, b2_ref, w3_ref, b3_ref):
    # MLP(dim_in, dim_hidden, dim_out, num_layer=3, p_drop=0):
    # Linear -> ReLU -> Linear -> ReLU -> Linear (dropout p=0 is a no-op).
    # x_b and all weight refs are bf16; accumulation, bias add and ReLU in f32.
    h = jnp.dot(x_b, w1_ref[...], preferred_element_type=jnp.float32) + b1_ref[...]
    h = jnp.maximum(h, 0.0).astype(jnp.bfloat16)
    h = jnp.dot(h, w2_ref[...], preferred_element_type=jnp.float32) + b2_ref[...]
    h = jnp.maximum(h, 0.0).astype(jnp.bfloat16)
    return jnp.dot(h, w3_ref[...], preferred_element_type=jnp.float32) + b3_ref[...]


def _lstm_step(x_b, c, w_ref, b_ref):
    # Single-step torch.nn.LSTM (seq_len=1), gate order i,f,g,o.
    # x_b = [h_prev | inputs...] in bf16, w_ref = [Whh ; Wih...] pre-stacked on
    # host, so the whole gate computation is ONE wide bf16 matmul with f32 acc.
    gates = jnp.dot(x_b, w_ref[...], preferred_element_type=jnp.float32) + b_ref[...]
    i = jax.nn.sigmoid(gates[:, 0 * H:1 * H])
    f = jax.nn.sigmoid(gates[:, 1 * H:2 * H])
    g = jnp.tanh(gates[:, 2 * H:3 * H])
    o = jax.nn.sigmoid(gates[:, 3 * H:4 * H])
    c_new = f * c + i * g
    h_new = o * jnp.tanh(c_new)
    return h_new, c_new


# ------------------------------- the kernel ----------------------------------
def neurosat_kernel(
    hL0_ref, hC0_ref, A_ref, AT_ref, P_ref, Mg_ref,
    lm_w1_ref, lm_b1_ref, lm_w2_ref, lm_b2_ref, lm_w3_ref, lm_b3_ref,   # L_msg MLP
    cm_w1_ref, cm_b1_ref, cm_w2_ref, cm_b2_ref, cm_w3_ref, cm_b3_ref,   # C_msg MLP
    cu_w_ref, cu_b_ref,                                                 # fused C_update LSTM
    lu_w_ref, lu_b_ref,                                                 # fused L_update LSTM
    lv_w1_ref, lv_b1_ref, lv_w2_ref, lv_b2_ref, lv_w3_ref, lv_b3_ref,   # L_vote MLP
    out_ref,
):
    def round_body(_, carry):
        hL, cL, hC, cC = carry
        hL_b = hL.astype(jnp.bfloat16)

        # literal -> clause aggregation (DeepSetConv, sum-aggr of L_msg(h_l)).
        msg_l = _mlp3(hL_b, lm_w1_ref, lm_b1_ref, lm_w2_ref, lm_b2_ref,
                      lm_w3_ref, lm_b3_ref).astype(jnp.bfloat16)
        c_msg = jnp.dot(A_ref[...], msg_l, preferred_element_type=jnp.float32)

        # fused C_update LSTM: gates = [hC | c_msg] @ [Whh ; Wih] + b
        x_c = jnp.concatenate(
            [hC.astype(jnp.bfloat16), c_msg.astype(jnp.bfloat16)], axis=1)
        hC, cC = _lstm_step(x_c, cC, cu_w_ref, cu_b_ref)

        # clause -> literal aggregation with freshly-updated clause states
        # (matches the in-place update order of the reference).
        msg_c = _mlp3(hC.astype(jnp.bfloat16), cm_w1_ref, cm_b1_ref, cm_w2_ref,
                      cm_b2_ref, cm_w3_ref, cm_b3_ref).astype(jnp.bfloat16)
        l_msg = jnp.dot(AT_ref[...], msg_c, preferred_element_type=jnp.float32)

        # flip(): swap positive/negative literal blocks of the *previous-round*
        # literal states (dense permutation matmul — graphs are heterogeneous).
        l_neg = jnp.dot(P_ref[...], hL_b, preferred_element_type=jnp.float32)

        # fused L_update LSTM: gates = [hL | l_msg | l_neg] @ [Whh ; Wmsg ; Wneg] + b
        x_l = jnp.concatenate(
            [hL_b, l_msg.astype(jnp.bfloat16), l_neg.astype(jnp.bfloat16)], axis=1)
        hL, cL = _lstm_step(x_l, cL, lu_w_ref, lu_b_ref)
        return hL, cL, hC, cC

    hL0 = hL0_ref[...]
    hC0 = hC0_ref[...]
    init = (hL0, jnp.zeros_like(hL0), hC0, jnp.zeros_like(hC0))
    hL, cL, hC, cC = lax.fori_loop(0, NUM_ROUNDS, round_body, init)

    # forward_head: L_vote MLP on literal h-states, per-graph mean over 2*n_vars.
    vote = _mlp3(hL.astype(jnp.bfloat16), lv_w1_ref, lv_b1_ref, lv_w2_ref,
                 lv_b2_ref, lv_w3_ref, lv_b3_ref)            # (NL_PAD, 1) f32
    out_ref[...] = jnp.dot(Mg_ref[...], vote, preferred_element_type=jnp.float32)


def neurosat_pallas(*inputs):
    # TODO(synk): for large batches on v7x, add a leading "parallel" grid axis
    # over graph groups so both TensorCores are used; a 2-graph batch does not
    # warrant it (on v5e/v6e the grid would just become a serial loop).
    return pl.pallas_call(
        neurosat_kernel,
        out_shape=jax.ShapeDtypeStruct((G_PAD, 1), jnp.float32),
        in_specs=[pl.BlockSpec(memory_space=pltpu.MemorySpace.VMEM)] * len(inputs),
        out_specs=pl.BlockSpec(memory_space=pltpu.MemorySpace.VMEM),
    )(*inputs)


# --------------------------- parameters & graphs ------------------------------
def make_params(key):
    p = {}

    def nxt():
        nonlocal key
        key, sub = jax.random.split(key)
        return sub

    def lin(fin, fout):
        bound = 1.0 / np.sqrt(fin)
        w = jax.random.uniform(nxt(), (fin, fout), jnp.float32, -bound, bound)
        b = jax.random.uniform(nxt(), (1, fout), jnp.float32, -bound, bound)
        return w, b

    # L_init / C_init : nn.Linear(1, 128) applied to the constant `one`
    w, b = lin(1, H)
    p['l_init'] = w + b            # (1, H)
    w, b = lin(1, H)
    p['c_init'] = w + b            # (1, H)

    # message MLPs (3 layers, 128 -> 128 -> 128)
    p['L_msg'] = lin(H, H) + lin(H, H) + lin(H, H)
    p['C_msg'] = lin(H, H) + lin(H, H) + lin(H, H)

    # LSTMs: gate order (i, f, g, o); b = b_ih + b_hh folded together
    def lstm_params(fin):
        bound = 1.0 / np.sqrt(H)
        wih = jax.random.uniform(nxt(), (fin, 4 * H), jnp.float32, -bound, bound)
        whh = jax.random.uniform(nxt(), (H, 4 * H), jnp.float32, -bound, bound)
        bias = (jax.random.uniform(nxt(), (1, 4 * H), jnp.float32, -bound, bound)
                + jax.random.uniform(nxt(), (1, 4 * H), jnp.float32, -bound, bound))
        return wih, whh, bias

    p['C_update'] = lstm_params(H)        # input = 128
    p['L_update'] = lstm_params(2 * H)    # input = 256 ([l_msg | l_neg])

    # L_vote MLP: 128 -> 128 -> 1
    p['L_vote'] = lin(H, H) + lin(H, H) + lin(H, 1)
    return p


def make_graphs(key):
    # Two small CNF graphs: (n_vars, n_clauses); each clause has 3 distinct literals.
    graphs = [(3, 5), (4, 6)]
    n_lits = sum(2 * nv for nv, _ in graphs)
    n_cls = sum(nc for _, nc in graphs)
    assert n_lits <= NL_PAD and n_cls <= NC_PAD and len(graphs) <= G_PAD

    A = np.zeros((NC_PAD, NL_PAD), np.float32)
    P = np.eye(NL_PAD, dtype=np.float32)
    Mg = np.zeros((G_PAD, NL_PAD), np.float32)
    lit_mask = np.zeros((NL_PAD, 1), np.float32)
    cls_mask = np.zeros((NC_PAD, 1), np.float32)
    lo = co = 0
    for g, (nv, nc) in enumerate(graphs):
        nl = 2 * nv
        lit_mask[lo:lo + nl, 0] = 1.0
        cls_mask[co:co + nc, 0] = 1.0
        Mg[g, lo:lo + nl] = 1.0 / (2.0 * nv)
        flip_src = np.concatenate([np.arange(lo + nv, lo + 2 * nv),
                                   np.arange(lo, lo + nv)])
        P[lo:lo + nl, :] = 0.0
        P[np.arange(lo, lo + nl), flip_src] = 1.0
        for c in range(nc):
            key, sub = jax.random.split(key)
            lits = np.asarray(jax.random.choice(sub, nl, (3,), replace=False))
            A[co + c, lo + lits] = 1.0
        lo += nl
        co += nc
    return len(graphs), A, A.T.copy(), P, Mg, lit_mask, cls_mask


# ------------------------------ pure-JAX reference ----------------------------
def reference_forward(hL0, hC0, A, AT, P, Mg, params):
    # Same mixed-precision recipe as the kernel (bf16 matmul operands, f32
    # accumulation, f32 carries/biases/nonlinearities), but structured like the
    # original torch module: separate Wih/Whh gate matmuls, concat of
    # [l_msg, l_neg] as the L_update input, etc.
    def bdot(a, b):
        return jnp.dot(a.astype(jnp.bfloat16), b.astype(jnp.bfloat16),
                       preferred_element_type=jnp.float32)

    def mlp3(x, pr):
        w1, b1, w2, b2, w3, b3 = pr
        h = jnp.maximum(bdot(x, w1) + b1, 0.0)
        h = jnp.maximum(bdot(h, w2) + b2, 0.0)
        return bdot(h, w3) + b3

    def lstm(x, h, c, pr):
        wih, whh, bias = pr
        g = bdot(x, wih) + bdot(h, whh) + bias
        i = jax.nn.sigmoid(g[:, :H])
        f = jax.nn.sigmoid(g[:, H:2 * H])
        gg = jnp.tanh(g[:, 2 * H:3 * H])
        o = jax.nn.sigmoid(g[:, 3 * H:])
        c = f * c + i * gg
        return o * jnp.tanh(c), c

    hL, cL = hL0, jnp.zeros_like(hL0)
    hC, cC = hC0, jnp.zeros_like(hC0)
    for _ in range(NUM_ROUNDS):
        hC, cC = lstm(bdot(A, mlp3(hL, params['L_msg'])), hC, cC, params['C_update'])
        x_l = jnp.concatenate([bdot(AT, mlp3(hC, params['C_msg'])), bdot(P, hL)],
                              axis=1)
        hL, cL = lstm(x_l, hL, cL, params['L_update'])
    return jnp.dot(Mg, mlp3(hL, params['L_vote']),
                   preferred_element_type=jnp.float32)


# ----------------------------------- main -------------------------------------
if __name__ == "__main__":
    root = jax.random.PRNGKey(0)
    pkey, gkey = jax.random.split(root)
    params = make_params(pkey)
    num_graphs, A, AT, P, Mg, lit_mask, cls_mask = make_graphs(gkey)

    A_f32 = jnp.asarray(A)
    AT_f32 = jnp.asarray(AT)
    P_f32 = jnp.asarray(P)
    Mg_f32 = jnp.asarray(Mg)
    # h_init = l_init * l_mask + c_init * c_mask  (literals/clauses kept separate)
    hL0 = jnp.asarray(lit_mask) * params['l_init']
    hC0 = jnp.asarray(cls_mask) * params['c_init']

    # ---- host-side weight prep: bf16 casts + fused LSTM weight stacks --------
    def mlp_inputs(pr):
        w1, b1, w2, b2, w3, b3 = pr
        return [w1.astype(jnp.bfloat16), b1,
                w2.astype(jnp.bfloat16), b2,
                w3.astype(jnp.bfloat16), b3]

    cu_wih, cu_whh, cu_b = params['C_update']
    lu_wih, lu_whh, lu_b = params['L_update']
    # gate matmul fused over K:  x = [h | inputs...]  @  [Whh ; Wih...]
    cu_W = jnp.concatenate([cu_whh, cu_wih], axis=0).astype(jnp.bfloat16)           # (256, 512)
    lu_W = jnp.concatenate([lu_whh, lu_wih[:H, :], lu_wih[H:, :]],
                           axis=0).astype(jnp.bfloat16)                              # (384, 512)

    kernel_inputs = [
        hL0, hC0,
        A_f32.astype(jnp.bfloat16), AT_f32.astype(jnp.bfloat16),
        P_f32.astype(jnp.bfloat16), Mg_f32,
        *mlp_inputs(params['L_msg']),
        *mlp_inputs(params['C_msg']),
        cu_W, cu_b,
        lu_W, lu_b,
        *mlp_inputs(params['L_vote']),
    ]

    out = jax.block_until_ready(neurosat_pallas(*kernel_inputs))
    pred = np.asarray(out)[:num_graphs, 0]

    ref = np.asarray(
        reference_forward(hL0, hC0, A_f32, AT_f32, P_f32, Mg_f32, params)
    )[:num_graphs, 0]

    assert np.all(np.isfinite(pred))
    np.testing.assert_allclose(pred, ref, rtol=2e-2, atol=2e-2)

    print("KERNEL_OK")
</pallas_src>

<mosaic_0001>
module attributes {stable_mosaic.version = 11 : i64} {
  func.func @neurosat_kernel(%arg0: memref<16x128xf32, #tpu.memory_space<vmem>>, %arg1: memref<16x128xf32, #tpu.memory_space<vmem>>, %arg2: memref<16x16xbf16, #tpu.memory_space<vmem>>, %arg3: memref<16x16xbf16, #tpu.memory_space<vmem>>, %arg4: memref<16x16xbf16, #tpu.memory_space<vmem>>, %arg5: memref<8x16xf32, #tpu.memory_space<vmem>>, %arg6: memref<128x128xbf16, #tpu.memory_space<vmem>>, %arg7: memref<1x128xf32, #tpu.memory_space<vmem>>, %arg8: memref<128x128xbf16, #tpu.memory_space<vmem>>, %arg9: memref<1x128xf32, #tpu.memory_space<vmem>>, %arg10: memref<128x128xbf16, #tpu.memory_space<vmem>>, %arg11: memref<1x128xf32, #tpu.memory_space<vmem>>, %arg12: memref<128x128xbf16, #tpu.memory_space<vmem>>, %arg13: memref<1x128xf32, #tpu.memory_space<vmem>>, %arg14: memref<128x128xbf16, #tpu.memory_space<vmem>>, %arg15: memref<1x128xf32, #tpu.memory_space<vmem>>, %arg16: memref<128x128xbf16, #tpu.memory_space<vmem>>, %arg17: memref<1x128xf32, #tpu.memory_space<vmem>>, %arg18: memref<256x512xbf16, #tpu.memory_space<vmem>>, %arg19: memref<1x512xf32, #tpu.memory_space<vmem>>, %arg20: memref<384x512xbf16, #tpu.memory_space<vmem>>, %arg21: memref<1x512xf32, #tpu.memory_space<vmem>>, %arg22: memref<128x128xbf16, #tpu.memory_space<vmem>>, %arg23: memref<1x128xf32, #tpu.memory_space<vmem>>, %arg24: memref<128x128xbf16, #tpu.memory_space<vmem>>, %arg25: memref<1x128xf32, #tpu.memory_space<vmem>>, %arg26: memref<128x1xbf16, #tpu.memory_space<vmem>>, %arg27: memref<1x1xf32, #tpu.memory_space<vmem>>, %arg28: memref<8x1xf32, #tpu.memory_space<vmem>>) attributes {dimension_semantics = [], scalar_prefetch = 0 : i64, scratch_operands = 0 : i64, tpu.core_type = #tpu.core_type<tc>} {
    %c0 = arith.constant 0 : index
    %c0_0 = arith.constant 0 : index
    %0 = vector.load %arg0[%c0, %c0_0] : memref<16x128xf32, #tpu.memory_space<vmem>>, vector<16x128xf32>
    %c0_1 = arith.constant 0 : index
    %c0_2 = arith.constant 0 : index
    %1 = vector.load %arg1[%c0_1, %c0_2] : memref<16x128xf32, #tpu.memory_space<vmem>>, vector<16x128xf32>
    %cst = arith.constant 0.000000e+00 : f32
    %2 = vector.broadcast %cst : f32 to vector<16x128xf32>
    %cst_3 = arith.constant 0.000000e+00 : f32
    %3 = vector.broadcast %cst_3 : f32 to vector<16x128xf32>
    %c0_i32 = arith.constant 0 : i32
    %c26_i32 = arith.constant 26 : i32
    %4 = arith.addi %c0_i32, %c26_i32 : i32
    %c1_i32 = arith.constant 1 : i32
    %5:4 = scf.for %arg29 = %c0_i32 to %4 step %c1_i32 iter_args(%arg30 = %0, %arg31 = %2, %arg32 = %1, %arg33 = %3) -> (vector<16x128xf32>, vector<16x128xf32>, vector<16x128xf32>, vector<16x128xf32>)  : i32 {
      %31 = arith.truncf %arg30 : vector<16x128xf32> to vector<16x128xbf16>
      %c0_26 = arith.constant 0 : index
      %c0_27 = arith.constant 0 : index
      %32 = vector.load %arg6[%c0_26, %c0_27] : memref<128x128xbf16, #tpu.memory_space<vmem>>, vector<128x128xbf16>
      %cst_28 = arith.constant dense<0.000000e+00> : vector<16x128xf32>
      %33 = tpu.matmul %31, %32, %cst_28 {dimension_numbers = #tpu.dot_dimension_numbers<[1], [0], [0], [1], [0, 0, 1, 1], [], []>} : vector<16x128xbf16>, vector<128x128xbf16>, vector<16x128xf32> -> vector<16x128xf32>
      %c0_29 = arith.constant 0 : index
      %c0_30 = arith.constant 0 : index
      %34 = vector.load %arg7[%c0_29, %c0_30] : memref<1x128xf32, #tpu.memory_space<vmem>>, vector<1x128xf32>
      %35 = vector.broadcast %34 : vector<1x128xf32> to vector<16x128xf32>
      %36 = arith.addf %33, %35 : vector<16x128xf32>
      %cst_31 = arith.constant 0.000000e+00 : f32
      %37 = vector.broadcast %cst_31 : f32 to vector<16x128xf32>
      %38 = arith.maximumf %36, %37 : vector<16x128xf32>
      %39 = arith.truncf %38 : vector<16x128xf32> to vector<16x128xbf16>
      %c0_32 = arith.constant 0 : index
      %c0_33 = arith.constant 0 : index
      %40 = vector.load %arg8[%c0_32, %c0_33] : memref<128x128xbf16, #tpu.memory_space<vmem>>, vector<128x128xbf16>
      %cst_34 = arith.constant dense<0.000000e+00> : vector<16x128xf32>
      %41 = tpu.matmul %39, %40, %cst_34 {dimension_numbers = #tpu.dot_dimension_numbers<[1], [0], [0], [1], [0, 0, 1, 1], [], []>} : vector<16x128xbf16>, vector<128x128xbf16>, vector<16x128xf32> -> vector<16x128xf32>
      %c0_35 = arith.constant 0 : index
      %c0_36 = arith.constant 0 : index
      %42 = vector.load %arg9[%c0_35, %c0_36] : memref<1x128xf32, #tpu.memory_space<vmem>>, vector<1x128xf32>
      %43 = vector.broadcast %42 : vector<1x128xf32> to vector<16x128xf32>
      %44 = arith.addf %41, %43 : vector<16x128xf32>
      %cst_37 = arith.constant 0.000000e+00 : f32
      %45 = vector.broadcast %cst_37 : f32 to vector<16x128xf32>
      %46 = arith.maximumf %44, %45 : vector<16x128xf32>
      %47 = arith.truncf %46 : vector<16x128xf32> to vector<16x128xbf16>
      %c0_38 = arith.constant 0 : index
      %c0_39 = arith.constant 0 : index
      %48 = vector.load %arg10[%c0_38, %c0_39] : memref<128x128xbf16, #tpu.memory_space<vmem>>, vector<128x128xbf16>
      %cst_40 = arith.constant dense<0.000000e+00> : vector<16x128xf32>
      %49 = tpu.matmul %47, %48, %cst_40 {dimension_numbers = #tpu.dot_dimension_numbers<[1], [0], [0], [1], [0, 0, 1, 1], [], []>} : vector<16x128xbf16>, vector<128x128xbf16>, vector<16x128xf32> -> vector<16x128xf32>
      %c0_41 = arith.constant 0 : index
      %c0_42 = arith.constant 0 : index
      %50 = vector.load %arg11[%c0_41, %c0_42] : memref<1x128xf32, #tpu.memory_space<vmem>>, vector<1x128xf32>
      %51 = vector.broadcast %50 : vector<1x128xf32> to vector<16x128xf32>
      %52 = arith.addf %49, %51 : vector<16x128xf32>
      %53 = arith.truncf %52 : vector<16x128xf32> to vector<16x128xbf16>
      %c0_43 = arith.constant 0 : index
      %c0_44 = arith.constant 0 : index
      %54 = vector.load %arg2[%c0_43, %c0_44] : memref<16x16xbf16, #tpu.memory_space<vmem>>, vector<16x16xbf16>
      %cst_45 = arith.constant dense<0.000000e+00> : vector<16x128xf32>
      %55 = tpu.matmul %54, %53, %cst_45 {dimension_numbers = #tpu.dot_dimension_numbers<[1], [0], [0], [1], [0, 0, 1, 1], [], []>} : vector<16x16xbf16>, vector<16x128xbf16>, vector<16x128xf32> -> vector<16x128xf32>
      %56 = arith.truncf %arg32 : vector<16x128xf32> to vector<16x128xbf16>
      %57 = arith.truncf %55 : vector<16x128xf32> to vector<16x128xbf16>
      %58 = tpu.concatenate %56, %57 in 1 : vector<16x128xbf16>, vector<16x128xbf16> -> vector<16x256xbf16>
      %c0_46 = arith.constant 0 : index
      %c0_47 = arith.constant 0 : index
      %59 = vector.load %arg18[%c0_46, %c0_47] : memref<256x512xbf16, #tpu.memory_space<vmem>>, vector<256x512xbf16>
      %cst_48 = arith.constant dense<0.000000e+00> : vector<16x512xf32>
      %60 = tpu.matmul %58, %59, %cst_48 {dimension_numbers = #tpu.dot_dimension_numbers<[1], [0], [0], [1], [0, 0, 1, 1], [], []>} : vector<16x256xbf16>, vector<256x512xbf16>, vector<16x512xf32> -> vector<16x512xf32>
      %c0_49 = arith.constant 0 : index
      %c0_50 = arith.constant 0 : index
      %61 = vector.load %arg19[%c0_49, %c0_50] : memref<1x512xf32, #tpu.memory_space<vmem>>, vector<1x512xf32>
      %62 = vector.broadcast %61 : vector<1x512xf32> to vector<16x512xf32>
      %63 = arith.addf %60, %62 : vector<16x512xf32>
      %64 = vector.extract_strided_slice %63 {offsets = [0, 0], sizes = [16, 128], strides = [1, 1]} : vector<16x512xf32> to vector<16x128xf32>
      %65 = arith.negf %64 : vector<16x128xf32>
      %66 = math.exp %65 : vector<16x128xf32>
      %cst_51 = arith.constant 1.000000e+00 : f32
      %67 = vector.broadcast %cst_51 : f32 to vector<16x128xf32>
      %68 = arith.addf %67, %66 : vector<16x128xf32>
      %69 = arith.divf %67, %68 : vector<16x128xf32>
      %70 = vector.extract_strided_slice %63 {offsets = [0, 128], sizes = [16, 128], strides = [1, 1]} : vector<16x512xf32> to vector<16x128xf32>
      %71 = arith.negf %70 : vector<16x128xf32>
      %72 = math.exp %71 : vector<16x128xf32>
      %cst_52 = arith.constant 1.000000e+00 : f32
      %73 = vector.broadcast %cst_52 : f32 to vector<16x128xf32>
      %74 = arith.addf %73, %72 : vector<16x128xf32>
      %75 = arith.divf %73, %74 : vector<16x128xf32>
      %76 = vector.extract_strided_slice %63 {offsets = [0, 256], sizes = [16, 128], strides = [1, 1]} : vector<16x512xf32> to vector<16x128xf32>
      %77 = math.tanh %76 : vector<16x128xf32>
      %78 = vector.extract_strided_slice %63 {offsets = [0, 384], sizes = [16, 128], strides = [1, 1]} : vector<16x512xf32> to vector<16x128xf32>
      %79 = arith.negf %78 : vector<16x128xf32>
      %80 = math.exp %79 : vector<16x128xf32>
      %cst_53 = arith.constant 1.000000e+00 : f32
      %81 = vector.broadcast %cst_53 : f32 to vector<16x128xf32>
      %82 = arith.addf %81, %80 : vector<16x128xf32>
      %83 = arith.divf %81, %82 : vector<16x128xf32>
      %84 = arith.mulf %75, %arg33 : vector<16x128xf32>
      %85 = arith.mulf %69, %77 : vector<16x128xf32>
      %86 = arith.addf %84, %85 : vector<16x128xf32>
      %87 = math.tanh %86 : vector<16x128xf32>
      %88 = arith.mulf %83, %87 : vector<16x128xf32>
      %89 = arith.truncf %88 : vector<16x128xf32> to vector<16x128xbf16>
      %c0_54 = arith.constant 0 : index
      %c0_55 = arith.constant 0 : index
      %90 = vector.load %arg12[%c0_54, %c0_55] : memref<128x128xbf16, #tpu.memory_space<vmem>>, vector<128x128xbf16>
      %cst_56 = arith.constant dense<0.000000e+00> : vector<16x128xf32>
      %91 = tpu.matmul %89, %90, %cst_56 {dimension_numbers = #tpu.dot_dimension_numbers<[1], [0], [0], [1], [0, 0, 1, 1], [], []>} : vector<16x128xbf16>, vector<128x128xbf16>, vector<16x128xf32> -> vector<16x128xf32>
      %c0_57 = arith.constant 0 : index
      %c0_58 = arith.constant 0 : index
      %92 = vector.load %arg13[%c0_57, %c0_58] : memref<1x128xf32, #tpu.memory_space<vmem>>, vector<1x128xf32>
      %93 = vector.broadcast %92 : vector<1x128xf32> to vector<16x128xf32>
      %94 = arith.addf %91, %93 : vector<16x128xf32>
      %cst_59 = arith.constant 0.000000e+00 : f32
      %95 = vector.broadcast %cst_59 : f32 to vector<16x128xf32>
      %96 = arith.maximumf %94, %95 : vector<16x128xf32>
      %97 = arith.truncf %96 : vector<16x128xf32> to vector<16x128xbf16>
      %c0_60 = arith.constant 0 : index
      %c0_61 = arith.constant 0 : index
      %98 = vector.load %arg14[%c0_60, %c0_61] : memref<128x128xbf16, #tpu.memory_space<vmem>>, vector<128x128xbf16>
      %cst_62 = arith.constant dense<0.000000e+00> : vector<16x128xf32>
      %99 = tpu.matmul %97, %98, %cst_62 {dimension_numbers = #tpu.dot_dimension_numbers<[1], [0], [0], [1], [0, 0, 1, 1], [], []>} : vector<16x128xbf16>, vector<128x128xbf16>, vector<16x128xf32> -> vector<16x128xf32>
      %c0_63 = arith.constant 0 : index
      %c0_64 = arith.constant 0 : index
      %100 = vector.load %arg15[%c0_63, %c0_64] : memref<1x128xf32, #tpu.memory_space<vmem>>, vector<1x128xf32>
      %101 = vector.broadcast %100 : vector<1x128xf32> to vector<16x128xf32>
      %102 = arith.addf %99, %101 : vector<16x128xf32>
      %cst_65 = arith.constant 0.000000e+00 : f32
      %103 = vector.broadcast %cst_65 : f32 to vector<16x128xf32>
      %104 = arith.maximumf %102, %103 : vector<16x128xf32>
      %105 = arith.truncf %104 : vector<16x128xf32> to vector<16x128xbf16>
      %c0_66 = arith.constant 0 : index
      %c0_67 = arith.constant 0 : index
      %106 = vector.load %arg16[%c0_66, %c0_67] : memref<128x128xbf16, #tpu.memory_space<vmem>>, vector<128x128xbf16>
      %cst_68 = arith.constant dense<0.000000e+00> : vector<16x128xf32>
      %107 = tpu.matmul %105, %106, %cst_68 {dimension_numbers = #tpu.dot_dimension_numbers<[1], [0], [0], [1], [0, 0, 1, 1], [], []>} : vector<16x128xbf16>, vector<128x128xbf16>, vector<16x128xf32> -> vector<16x128xf32>
      %c0_69 = arith.constant 0 : index
      %c0_70 = arith.constant 0 : index
      %108 = vector.load %arg17[%c0_69, %c0_70] : memref<1x128xf32, #tpu.memory_space<vmem>>, vector<1x128xf32>
      %109 = vector.broadcast %108 : vector<1x128xf32> to vector<16x128xf32>
      %110 = arith.addf %107, %109 : vector<16x128xf32>
      %111 = arith.truncf %110 : vector<16x128xf32> to vector<16x128xbf16>
      %c0_71 = arith.constant 0 : index
      %c0_72 = arith.constant 0 : index
      %112 = vector.load %arg3[%c0_71, %c0_72] : memref<16x16xbf16, #tpu.memory_space<vmem>>, vector<16x16xbf16>
      %cst_73 = arith.constant dense<0.000000e+00> : vector<16x128xf32>
      %113 = tpu.matmul %112, %111, %cst_73 {dimension_numbers = #tpu.dot_dimension_numbers<[1], [0], [0], [1], [0, 0, 1, 1], [], []>} : vector<16x16xbf16>, vector<16x128xbf16>, vector<16x128xf32> -> vector<16x128xf32>
      %c0_74 = arith.constant 0 : index
      %c0_75 = arith.constant 0 : index
      %114 = vector.load %arg4[%c0_74, %c0_75] : memref<16x16xbf16, #tpu.memory_space<vmem>>, vector<16x16xbf16>
      %cst_76 = arith.constant dense<0.000000e+00> : vector<16x128xf32>
      %115 = tpu.matmul %114, %31, %cst_76 {dimension_numbers = #tpu.dot_dimension_numbers<[1], [0], [0], [1], [0, 0, 1, 1], [], []>} : vector<16x16xbf16>, vector<16x128xbf16>, vector<16x128xf32> -> vector<16x128xf32>
      %116 = arith.truncf %113 : vector<16x128xf32> to vector<16x128xbf16>
      %117 = arith.truncf %115 : vector<16x128xf32> to vector<16x128xbf16>
      %118 = tpu.concatenate %31, %116, %117 in 1 : vector<16x128xbf16>, vector<16x128xbf16>, vector<16x128xbf16> -> vector<16x384xbf16>
      %c0_77 = arith.constant 0 : index
      %c0_78 = arith.constant 0 : index
      %119 = vector.load %arg20[%c0_77, %c0_78] : memref<384x512xbf16, #tpu.memory_space<vmem>>, vector<384x512xbf16>
      %cst_79 = arith.constant dense<0.000000e+00> : vector<16x512xf32>
      %120 = tpu.matmul %118, %119, %cst_79 {dimension_numbers = #tpu.dot_dimension_numbers<[1], [0], [0], [1], [0, 0, 1, 1], [], []>} : vector<16x384xbf16>, vector<384x512xbf16>, vector<16x512xf32> -> vector<16x512xf32>
      %c0_80 = arith.constant 0 : index
      %c0_81 = arith.constant 0 : index
      %121 = vector.load %arg21[%c0_80, %c0_81] : memref<1x512xf32, #tpu.memory_space<vmem>>, vector<1x512xf32>
      %122 = vector.broadcast %121 : vector<1x512xf32> to vector<16x512xf32>
      %123 = arith.addf %120, %122 : vector<16x512xf32>
      %124 = vector.extract_strided_slice %123 {offsets = [0, 0], sizes = [16, 128], strides = [1, 1]} : vector<16x512xf32> to vector<16x128xf32>
      %125 = arith.negf %124 : vector<16x128xf32>
      %126 = math.exp %125 : vector<16x128xf32>
      %cst_82 = arith.constant 1.000000e+00 : f32
      %127 = vector.broadcast %cst_82 : f32 to vector<16x128xf32>
      %128 = arith.addf %127, %126 : vector<16x128xf32>
      %129 = arith.divf %127, %128 : vector<16x128xf32>
      %130 = vector.extract_strided_slice %123 {offsets = [0, 128], sizes = [16, 128], strides = [1, 1]} : vector<16x512xf32> to vector<16x128xf32>
      %131 = arith.negf %130 : vector<16x128xf32>
      %132 = math.exp %131 : vector<16x128xf32>
      %cst_83 = arith.constant 1.000000e+00 : f32
      %133 = vector.broadcast %cst_83 : f32 to vector<16x128xf32>
      %134 = arith.addf %133, %132 : vector<16x128xf32>
      %135 = arith.divf %133, %134 : vector<16x128xf32>
      %136 = vector.extract_strided_slice %123 {offsets = [0, 256], sizes = [16, 128], strides = [1, 1]} : vector<16x512xf32> to vector<16x128xf32>
      %137 = math.tanh %136 : vector<16x128xf32>
      %138 = vector.extract_strided_slice %123 {offsets = [0, 384], sizes = [16, 128], strides = [1, 1]} : vector<16x512xf32> to vector<16x128xf32>
      %139 = arith.negf %138 : vector<16x128xf32>
      %140 = math.exp %139 : vector<16x128xf32>
      %cst_84 = arith.constant 1.000000e+00 : f32
      %141 = vector.broadcast %cst_84 : f32 to vector<16x128xf32>
      %142 = arith.addf %141, %140 : vector<16x128xf32>
      %143 = arith.divf %141, %142 : vector<16x128xf32>
      %144 = arith.mulf %135, %arg31 : vector<16x128xf32>
      %145 = arith.mulf %129, %137 : vector<16x128xf32>
      %146 = arith.addf %144, %145 : vector<16x128xf32>
      %147 = math.tanh %146 : vector<16x128xf32>
      %148 = arith.mulf %143, %147 : vector<16x128xf32>
      scf.yield %148, %146, %88, %86 : vector<16x128xf32>, vector<16x128xf32>, vector<16x128xf32>, vector<16x128xf32>
    }
    %6 = arith.truncf %5#0 : vector<16x128xf32> to vector<16x128xbf16>
    %c0_4 = arith.constant 0 : index
    %c0_5 = arith.constant 0 : index
    %7 = vector.load %arg22[%c0_4, %c0_5] : memref<128x128xbf16, #tpu.memory_space<vmem>>, vector<128x128xbf16>
    %cst_6 = arith.constant dense<0.000000e+00> : vector<16x128xf32>
    %8 = tpu.matmul %6, %7, %cst_6 {dimension_numbers = #tpu.dot_dimension_numbers<[1], [0], [0], [1], [0, 0, 1, 1], [], []>} : vector<16x128xbf16>, vector<128x128xbf16>, vector<16x128xf32> -> vector<16x128xf32>
    %c0_7 = arith.constant 0 : index
    %c0_8 = arith.constant 0 : index
    %9 = vector.load %arg23[%c0_7, %c0_8] : memref<1x128xf32, #tpu.memory_space<vmem>>, vector<1x128xf32>
    %10 = vector.broadcast %9 : vector<1x128xf32> to vector<16x128xf32>
    %11 = arith.addf %8, %10 : vector<16x128xf32>
    %cst_9 = arith.constant 0.000000e+00 : f32
    %12 = vector.broadcast %cst_9 : f32 to vector<16x128xf32>
    %13 = arith.maximumf %11, %12 : vector<16x128xf32>
    %14 = arith.truncf %13 : vector<16x128xf32> to vector<16x128xbf16>
    %c0_10 = arith.constant 0 : index
    %c0_11 = arith.constant 0 : index
    %15 = vector.load %arg24[%c0_10, %c0_11] : memref<128x128xbf16, #tpu.memory_space<vmem>>, vector<128x128xbf16>
    %cst_12 = arith.constant dense<0.000000e+00> : vector<16x128xf32>
    %16 = tpu.matmul %14, %15, %cst_12 {dimension_numbers = #tpu.dot_dimension_numbers<[1], [0], [0], [1], [0, 0, 1, 1], [], []>} : vector<16x128xbf16>, vector<128x128xbf16>, vector<16x128xf32> -> vector<16x128xf32>
    %c0_13 = arith.constant 0 : index
    %c0_14 = arith.constant 0 : index
    %17 = vector.load %arg25[%c0_13, %c0_14] : memref<1x128xf32, #tpu.memory_space<vmem>>, vector<1x128xf32>
    %18 = vector.broadcast %17 : vector<1x128xf32> to vector<16x128xf32>
    %19 = arith.addf %16, %18 : vector<16x128xf32>
    %cst_15 = arith.constant 0.000000e+00 : f32
    %20 = vector.broadcast %cst_15 : f32 to vector<16x128xf32>
    %21 = arith.maximumf %19, %20 : vector<16x128xf32>
    %22 = arith.truncf %21 : vector<16x128xf32> to vector<16x128xbf16>
    %c0_16 = arith.constant 0 : index
    %c0_17 = arith.constant 0 : index
    %23 = vector.load %arg26[%c0_16, %c0_17] : memref<128x1xbf16, #tpu.memory_space<vmem>>, vector<128x1xbf16>
    %cst_18 = arith.constant dense<0.000000e+00> : vector<16x1xf32>
    %24 = tpu.matmul %22, %23, %cst_18 {dimension_numbers = #tpu.dot_dimension_numbers<[1], [0], [0], [1], [0, 0, 1, 1], [], []>} : vector<16x128xbf16>, vector<128x1xbf16>, vector<16x1xf32> -> vector<16x1xf32>
    %c0_19 = arith.constant 0 : index
    %c0_20 = arith.constant 0 : index
    %25 = vector.load %arg27[%c0_19, %c0_20] : memref<1x1xf32, #tpu.memory_space<vmem>>, vector<1x1xf32>
    %26 = vector.broadcast %25 : vector<1x1xf32> to vector<16x1xf32>
    %27 = arith.addf %24, %26 : vector<16x1xf32>
    %c0_21 = arith.constant 0 : index
    %c0_22 = arith.constant 0 : index
    %28 = vector.load %arg5[%c0_21, %c0_22] : memref<8x16xf32, #tpu.memory_space<vmem>>, vector<8x16xf32>
    %cst_23 = arith.constant dense<0.000000e+00> : vector<8x1xf32>
    %29 = tpu.matmul %28, %27, %cst_23 {dimension_numbers = #tpu.dot_dimension_numbers<[1], [0], [0], [1], [0, 0, 1, 1], [], []>} : vector<8x16xf32>, vector<16x1xf32>, vector<8x1xf32> -> vector<8x1xf32>
    %c0_24 = arith.constant 0 : index
    %c0_25 = arith.constant 0 : index
    %30 = vector.load %arg28[%c0_24, %c0_25] : memref<8x1xf32, #tpu.memory_space<vmem>>, vector<8x1xf32>
    tpu.vector_store %arg28[%c0_24, %c0_25], %29 {strides = array<i32>} : memref<8x1xf32, #tpu.memory_space<vmem>>, vector<8x1xf32>,
    return
  }
}

</mosaic_0001>

<llo_original>
// kernel: tpu_custom_call.1
$region0: #{tpu_custom_call.1}
  #allocation0 [shape = 'u32[]', space=smem, size = 0x4, offset = 0x4, fixed_abs, tag = 'smem constant byte address 0x4 - core index']
  #allocation1 [shape = 'u32[72,128]{1,0:T(1,128)}', space=vmem, size = 0x9000, scoped, tag = 'internal scratch']
  #allocation2 [shape = 'f32[1,1]{1,0:T(1,128)S(1)}', space=vmem, size = 0x200, scoped, tag = 'scoped memory for tpu_custom_call.1']
  %s0 = inlined_call_operand.hbm [shape: f32[16,128], index: 0, kind: input, shape index: {}]
  %s1 = inlined_call_operand.hbm [shape: f32[16,128], index: 1, kind: input, shape index: {}]
  %s2 = inlined_call_operand.hbm [shape: bf16[16,16], index: 2, kind: input, shape index: {}]
  %s3 = inlined_call_operand.hbm [shape: bf16[16,16], index: 3, kind: input, shape index: {}]
  %s4 = inlined_call_operand.hbm [shape: bf16[16,16], index: 4, kind: input, shape index: {}]
  %s5 = inlined_call_operand.hbm [shape: f32[8,16], index: 5, kind: input, shape index: {}]
  %s6 = inlined_call_operand.vmem [shape: bf16[128,128], index: 6, kind: input, shape index: {}]
  %s7 = inlined_call_operand.vmem [shape: f32[1,128], index: 7, kind: input, shape index: {}]
  %s8 = inlined_call_operand.hbm [shape: bf16[128,128], index: 8, kind: input, shape index: {}]
  %s9 = inlined_call_operand.vmem [shape: f32[1,128], index: 9, kind: input, shape index: {}]
  %s10 = inlined_call_operand.hbm [shape: bf16[128,128], index: 10, kind: input, shape index: {}]
  %s11 = inlined_call_operand.vmem [shape: f32[1,128], index: 11, kind: input, shape index: {}]
  %s12 = inlined_call_operand.hbm [shape: bf16[128,128], index: 12, kind: input, shape index: {}]
  %s13 = inlined_call_operand.vmem [shape: f32[1,128], index: 13, kind: input, shape index: {}]
  %s14 = inlined_call_operand.hbm [shape: bf16[128,128], index: 14, kind: input, shape index: {}]
  %s15 = inlined_call_operand.vmem [shape: f32[1,128], index: 15, kind: input, shape index: {}]
  %s16 = inlined_call_operand.hbm [shape: bf16[128,128], index: 16, kind: input, shape index: {}]
  %s17 = inlined_call_operand.vmem [shape: f32[1,128], index: 17, kind: input, shape index: {}]
  %s18 = inlined_call_operand.hbm [shape: bf16[256,512], index: 18, kind: input, shape index: {}]
  %s19 = inlined_call_operand.vmem [shape: f32[1,512], index: 19, kind: input, shape index: {}]
  %s20 = inlined_call_operand.hbm [shape: bf16[384,512], index: 20, kind: input, shape index: {}]
  %s21 = inlined_call_operand.vmem [shape: f32[1,512], index: 21, kind: input, shape index: {}]
  %s22 = inlined_call_operand.hbm [shape: bf16[128,128], index: 22, kind: input, shape index: {}]
  %s23 = inlined_call_operand.vmem [shape: f32[1,128], index: 23, kind: input, shape index: {}]
  %s24 = inlined_call_operand.hbm [shape: bf16[128,128], index: 24, kind: input, shape index: {}]
  %s25 = inlined_call_operand.vmem [shape: f32[1,128], index: 25, kind: input, shape index: {}]
  %s26 = inlined_call_operand.vmem [shape: bf16[128,1], index: 26, kind: input, shape index: {}]
  %s27 = inlined_call_operand.<no memory space> [shape: f32[1,1], index: 27, kind: input, shape index: {}]
  %s28 = inlined_call_operand.vmem [shape: f32[8,1], index: 28, kind: output, shape index: {}]
  %s29 = sld [smem:[#allocation0]]
  $region189: #{tpu_custom_call.1} parent=0
    _
  %s31 = ssub.s32 1, %s29
  %s32 = scalar_select 0, %s31, %s29
  %v33 = vstv %s27
  %34 = vst [vmem:[#allocation2] sm:$0x1] %v33
  $region1: #{tpu_custom_call.1} parent=0
    #allocation3 [shape = 'u8[8192]{0}', space=vmem, size = 0x2000, scoped, tag = 'input window, operand 0, single buffered']
    #allocation4 [shape = 's32[1]{0}', space=sflag, size = 0x4, scoped, tag = 'scoped memory for tpu_custom_call.1']
    #allocation5 [shape = 'u8[8192]{0}', space=vmem, size = 0x2000, scoped, tag = 'input window, operand 1, single buffered']
    #allocation6 [shape = 's32[1]{0}', space=sflag, size = 0x4, scoped, tag = 'scoped memory for tpu_custom_call.1']
    #allocation7 [shape = 'u8[4096]{0}', space=vmem, size = 0x1000, scoped, tag = 'input window, operand 2, single buffered']
    #allocation8 [shape = 'u8[4096]{0}', space=vmem, size = 0x1000, scoped, tag = 'input window, operand 3, single buffered']
    #allocation9 [shape = 's32[1]{0}', space=sflag, size = 0x4, scoped, tag = 'scoped memory for tpu_custom_call.1']
    #allocation10 [shape = 'u8[4096]{0}', space=vmem, size = 0x1000, scoped, tag = 'input window, operand 4, single buffered']
    #allocation11 [shape = 'u8[4096]{0}', space=vmem, size = 0x1000, scoped, tag = 'input window, operand 5, single buffered']
    #allocation12 [shape = 's32[1]{0}', space=sflag, size = 0x4, scoped, tag = 'scoped memory for tpu_custom_call.1']
    #allocation13 [shape = 'u8[32768]{0}', space=vmem, size = 0x8000, scoped, tag = 'input window, operand 8, single buffered']
    #allocation14 [shape = 'u8[32768]{0}', space=vmem, size = 0x8000, scoped, tag = 'input window, operand 10, single buffered']
    #allocation15 [shape = 's32[1]{0}', space=sflag, size = 0x4, scoped, tag = 'scoped memory for tpu_custom_call.1']
    #allocation16 [shape = 'u8[32768]{0}', space=vmem, size = 0x8000, scoped, tag = 'input window, operand 12, single buffered']
    #allocation17 [shape = 'u8[32768]{0}', space=vmem, size = 0x8000, scoped, tag = 'input window, operand 14, single buffered']
    #allocation18 [shape = 's32[1]{0}', space=sflag, size = 0x4, scoped, tag = 'scoped memory for tpu_custom_call.1']
    #allocation19 [shape = 'u8[32768]{0}', space=vmem, size = 0x8000, scoped, tag = 'input window, operand 16, single buffered']
    #allocation20 [shape = 'u8[262144]{0}', space=vmem, size = 0x40000, scoped, tag = 'input window, operand 18, single buffered']
    #allocation21 [shape = 's32[1]{0}', space=sflag, size = 0x4, scoped, tag = 'scoped memory for tpu_custom_call.1']
    #allocation22 [shape = 'u8[393216]{0}', space=vmem, size = 0x60000, scoped, tag = 'input window, operand 20, single buffered']
    #allocation23 [shape = 'u8[32768]{0}', space=vmem, size = 0x8000, scoped, tag = 'input window, operand 22, single buffered']
    #allocation24 [shape = 's32[1]{0}', space=sflag, size = 0x4, scoped, tag = 'scoped memory for tpu_custom_call.1']
    #allocation25 [shape = 'u8[32768]{0}', space=vmem, size = 0x8000, scoped, tag = 'input window, operand 24, single buffered']
    %35 = vsyncpa [#allocation4], 0
    %36 = vsyncpa [#allocation6], 0
    %37 = vsyncpa [#allocation9], 0
    %38 = vsyncpa [#allocation12], 0
    %39 = vsyncpa [#allocation15], 0
    %40 = vsyncpa [#allocation18], 0
    %41 = vsyncpa [#allocation21], 0
    %42 = vsyncpa [#allocation24], 0
    // Predicated region
    $region2: #{tpu_custom_call.1} parent=1 // pred_check
      _
    $region3: #{tpu_custom_call.1} parent=1 // pred_check_branch
      %44 = sbr.rel (0) target = $region5
    $region4: #{tpu_custom_call.1} parent=1 // pred_region
      %46 = vsyncadd [#allocation4], 0
      %s47 = sshll.u32 %s0, 4
      %s48 = int_to_ptr.hbm [resolvable:$true] %s47
      %s49 = sshll.u32 [#allocation3], 4
      %s50 = int_to_ptr.vmem [resolvable:$true] %s49
      %55 = dma.hbm_to_vmem [thread:$0]  %s48, 256, %s50, [#allocation4], 128, 128, 8
    $region5: #{tpu_custom_call.1} parent=1 // pred_fallthru
      _
    // Predicated region
    $region6: #{tpu_custom_call.1} parent=1 // pred_check
      _
    $region7: #{tpu_custom_call.1} parent=1 // pred_check_branch
      %57 = sbr.rel (0) target = $region9
    $region8: #{tpu_custom_call.1} parent=1 // pred_region
      %59 = vsyncadd [#allocation6], 0
      %s60 = sshll.u32 %s1, 4
      %s61 = int_to_ptr.hbm [resolvable:$true] %s60
      %s62 = sshll.u32 [#allocation5], 4
      %s63 = int_to_ptr.vmem [resolvable:$true] %s62
      %68 = dma.hbm_to_vmem [thread:$0]  %s61, 256, %s63, [#allocation6], 128, 128, 8
    $region9: #{tpu_custom_call.1} parent=1 // pred_fallthru
      _
    // Predicated region
    $region10: #{tpu_custom_call.1} parent=1 // pred_check
      _
    $region11: #{tpu_custom_call.1} parent=1 // pred_check_branch
      %70 = sbr.rel (0) target = $region13
    $region12: #{tpu_custom_call.1} parent=1 // pred_region
      %72 = vsyncadd [#allocation6], 0
      %s73 = sshll.u32 %s2, 4
      %s74 = int_to_ptr.hbm [resolvable:$true] %s73
      %s75 = sshll.u32 [#allocation7], 4
      %s76 = int_to_ptr.vmem [resolvable:$true] %s75
      %81 = dma.hbm_to_vmem [thread:$0]  %s74, 128, %s76, [#allocation6], 64, 64, 4
    $region13: #{tpu_custom_call.1} parent=1 // pred_fallthru
      _
    // Predicated region
    $region14: #{tpu_custom_call.1} parent=1 // pred_check
      _
    $region15: #{tpu_custom_call.1} parent=1 // pred_check_branch
      %83 = sbr.rel (0) target = $region17
    $region16: #{tpu_custom_call.1} parent=1 // pred_region
      %85 = vsyncadd [#allocation9], 0
      %s86 = sshll.u32 %s3, 4
      %s87 = int_to_ptr.hbm [resolvable:$true] %s86
      %s88 = sshll.u32 [#allocation8], 4
      %s89 = int_to_ptr.vmem [resolvable:$true] %s88
      %94 = dma.hbm_to_vmem [thread:$0]  %s87, 128, %s89, [#allocation9], 64, 64, 4
    $region17: #{tpu_custom_call.1} parent=1 // pred_fallthru
      _
    // Predicated region
    $region18: #{tpu_custom_call.1} parent=1 // pred_check
      _
    $region19: #{tpu_custom_call.1} parent=1 // pred_check_branch
      %96 = sbr.rel (0) target = $region21
    $region20: #{tpu_custom_call.1} parent=1 // pred_region
      %98 = vsyncadd [#allocation9], 0
      %s99 = sshll.u32 %s4, 4
      %s100 = int_to_ptr.hbm [resolvable:$true] %s99
      %s101 = sshll.u32 [#allocation10], 4
      %s102 = int_to_ptr.vmem [resolvable:$true] %s101
      %107 = dma.hbm_to_vmem [thread:$0]  %s100, 128, %s102, [#allocation9], 64, 64, 4
    $region21: #{tpu_custom_call.1} parent=1 // pred_fallthru
      _
    // Predicated region
    $region22: #{tpu_custom_call.1} parent=1 // pred_check
      _
    $region23: #{tpu_custom_call.1} parent=1 // pred_check_branch
      %109 = sbr.rel (0) target = $region25
    $region24: #{tpu_custom_call.1} parent=1 // pred_region
      %111 = vsyncadd [#allocation12], 0
      %s113 = sshll.u32 %s5, 4
      %s114 = int_to_ptr.hbm [resolvable:$true] %s113
      %s115 = sshll.u32 [#allocation11], 4
      %s116 = int_to_ptr.vmem [resolvable:$true] %s115
      %118 = dma.hbm_to_vmem [thread:$0]  %s114, 128, %s116, [#allocation12]
    $region25: #{tpu_custom_call.1} parent=1 // pred_fallthru
      _
    // Predicated region
    $region26: #{tpu_custom_call.1} parent=1 // pred_check
      _
    $region27: #{tpu_custom_call.1} parent=1 // pred_check_branch
      %120 = sbr.rel (0) target = $region29
    $region28: #{tpu_custom_call.1} parent=1 // pred_region
      _
    $region29: #{tpu_custom_call.1} parent=1 // pred_fallthru
      _
    // Predicated region
    $region30: #{tpu_custom_call.1} parent=1 // pred_check
      _
    $region31: #{tpu_custom_call.1} parent=1 // pred_check_branch
      %122 = sbr.rel (0) target = $region33
    $region32: #{tpu_custom_call.1} parent=1 // pred_region
      _
    $region33: #{tpu_custom_call.1} parent=1 // pred_fallthru
      _
    // Predicated region
    $region34: #{tpu_custom_call.1} parent=1 // pred_check
      _
    $region35: #{tpu_custom_call.1} parent=1 // pred_check_branch
      %124 = sbr.rel (0) target = $region37
    $region36: #{tpu_custom_call.1} parent=1 // pred_region
      %126 = vsyncadd [#allocation12], 0
      %s127 = sshll.u32 %s8, 4
      %s128 = int_to_ptr.hbm [resolvable:$true] %s127
      %s129 = sshll.u32 [#allocation13], 4
      %s130 = int_to_ptr.vmem [resolvable:$true] %s129
      %135 = dma.hbm_to_vmem [thread:$0]  %s128, 1024, %s130, [#allocation12], 64, 64, 4
    $region37: #{tpu_custom_call.1} parent=1 // pred_fallthru
      _
    // Predicated region
    $region38: #{tpu_custom_call.1} parent=1 // pred_check
      _
    $region39: #{tpu_custom_call.1} parent=1 // pred_check_branch
      %137 = sbr.rel (0) target = $region41
    $region40: #{tpu_custom_call.1} parent=1 // pred_region
      _
    $region41: #{tpu_custom_call.1} parent=1 // pred_fallthru
      _
    // Predicated region
    $region42: #{tpu_custom_call.1} parent=1 // pred_check
      _
    $region43: #{tpu_custom_call.1} parent=1 // pred_check_branch
      %139 = sbr.rel (0) target = $region45
    $region44: #{tpu_custom_call.1} parent=1 // pred_region
      %141 = vsyncadd [#allocation15], 0
      %s142 = sshll.u32 %s10, 4
      %s143 = int_to_ptr.hbm [resolvable:$true] %s142
      %s144 = sshll.u32 [#allocation14], 4
      %s145 = int_to_ptr.vmem [resolvable:$true] %s144
      %150 = dma.hbm_to_vmem [thread:$0]  %s143, 1024, %s145, [#allocation15], 64, 64, 4
    $region45: #{tpu_custom_call.1} parent=1 // pred_fallthru
      _
    // Predicated region
    $region46: #{tpu_custom_call.1} parent=1 // pred_check
      _
    $region47: #{tpu_custom_call.1} parent=1 // pred_check_branch
      %152 = sbr.rel (0) target = $region49
    $region48: #{tpu_custom_call.1} parent=1 // pred_region
      _
    $region49: #{tpu_custom_call.1} parent=1 // pred_fallthru
      _
    // Predicated region
    $region50: #{tpu_custom_call.1} parent=1 // pred_check
      _
    $region51: #{tpu_custom_call.1} parent=1 // pred_check_branch
      %154 = sbr.rel (0) target = $region53
    $region52: #{tpu_custom_call.1} parent=1 // pred_region
      %156 = vsyncadd [#allocation15], 0
      %s157 = sshll.u32 %s12, 4
      %s158 = int_to_ptr.hbm [resolvable:$true] %s157
      %s159 = sshll.u32 [#allocation16], 4
      %s160 = int_to_ptr.vmem [resolvable:$true] %s159
      %165 = dma.hbm_to_vmem [thread:$0]  %s158, 1024, %s160, [#allocation15], 64, 64, 4
    $region53: #{tpu_custom_call.1} parent=1 // pred_fallthru
      _
    // Predicated region
    $region54: #{tpu_custom_call.1} parent=1 // pred_check
      _
    $region55: #{tpu_custom_call.1} parent=1 // pred_check_branch
      %167 = sbr.rel (0) target = $region57
    $region56: #{tpu_custom_call.1} parent=1 // pred_region
      _
    $region57: #{tpu_custom_call.1} parent=1 // pred_fallthru
      _
    // Predicated region
    $region58: #{tpu_custom_call.1} parent=1 // pred_check
      _
    $region59: #{tpu_custom_call.1} parent=1 // pred_check_branch
      %169 = sbr.rel (0) target = $region61
    $region60: #{tpu_custom_call.1} parent=1 // pred_region
      %171 = vsyncadd [#allocation18], 0
      %s172 = sshll.u32 %s14, 4
      %s173 = int_to_ptr.hbm [resolvable:$true] %s172
      %s174 = sshll.u32 [#allocation17], 4
      %s175 = int_to_ptr.vmem [resolvable:$true] %s174
      %180 = dma.hbm_to_vmem [thread:$0]  %s173, 1024, %s175, [#allocation18], 64, 64, 4
    $region61: #{tpu_custom_call.1} parent=1 // pred_fallthru
      _
    // Predicated region
    $region62: #{tpu_custom_call.1} parent=1 // pred_check
      _
    $region63: #{tpu_custom_call.1} parent=1 // pred_check_branch
      %182 = sbr.rel (0) target = $region65
    $region64: #{tpu_custom_call.1} parent=1 // pred_region
      _
    $region65: #{tpu_custom_call.1} parent=1 // pred_fallthru
      _
    // Predicated region
    $region66: #{tpu_custom_call.1} parent=1 // pred_check
      _
    $region67: #{tpu_custom_call.1} parent=1 // pred_check_branch
      %184 = sbr.rel (0) target = $region69
    $region68: #{tpu_custom_call.1} parent=1 // pred_region
      %186 = vsyncadd [#allocation18], 0
      %s187 = sshll.u32 %s16, 4
      %s188 = int_to_ptr.hbm [resolvable:$true] %s187
      %s189 = sshll.u32 [#allocation19], 4
      %s190 = int_to_ptr.vmem [resolvable:$true] %s189
      %195 = dma.hbm_to_vmem [thread:$0]  %s188, 1024, %s190, [#allocation18], 64, 64, 4
    $region69: #{tpu_custom_call.1} parent=1 // pred_fallthru
      _
    // Predicated region
    $region70: #{tpu_custom_call.1} parent=1 // pred_check
      _
    $region71: #{tpu_custom_call.1} parent=1 // pred_check_branch
      %197 = sbr.rel (0) target = $region73
    $region72: #{tpu_custom_call.1} parent=1 // pred_region
      _
    $region73: #{tpu_custom_call.1} parent=1 // pred_fallthru
      _
    // Predicated region
    $region74: #{tpu_custom_call.1} parent=1 // pred_check
      _
    $region75: #{tpu_custom_call.1} parent=1 // pred_check_branch
      %199 = sbr.rel (0) target = $region77
    $region76: #{tpu_custom_call.1} parent=1 // pred_region
      %201 = vsyncadd [#allocation21], 0
      %s202 = sshll.u32 %s18, 4
      %s203 = int_to_ptr.hbm [resolvable:$true] %s202
      %s204 = sshll.u32 [#allocation20], 4
      %s205 = int_to_ptr.vmem [resolvable:$true] %s204
      %210 = dma.hbm_to_vmem [thread:$0]  %s203, 8192, %s205, [#allocation21], 256, 256, 16
    $region77: #{tpu_custom_call.1} parent=1 // pred_fallthru
      _
    // Predicated region
    $region78: #{tpu_custom_call.1} parent=1 // pred_check
      _
    $region79: #{tpu_custom_call.1} parent=1 // pred_check_branch
      %212 = sbr.rel (0) target = $region81
    $region80: #{tpu_custom_call.1} parent=1 // pred_region
      _
    $region81: #{tpu_custom_call.1} parent=1 // pred_fallthru
      _
    // Predicated region
    $region82: #{tpu_custom_call.1} parent=1 // pred_check
      _
    $region83: #{tpu_custom_call.1} parent=1 // pred_check_branch
      %214 = sbr.rel (0) target = $region85
    $region84: #{tpu_custom_call.1} parent=1 // pred_region
      %216 = vsyncadd [#allocation21], 0
      %s217 = sshll.u32 %s20, 4
      %s218 = int_to_ptr.hbm [resolvable:$true] %s217
      %s219 = sshll.u32 [#allocation22], 4
      %s220 = int_to_ptr.vmem [resolvable:$true] %s219
      %225 = dma.hbm_to_vmem [thread:$0]  %s218, 12288, %s220, [#allocation21], 256, 256, 16
    $region85: #{tpu_custom_call.1} parent=1 // pred_fallthru
      _
    // Predicated region
    $region86: #{tpu_custom_call.1} parent=1 // pred_check
      _
    $region87: #{tpu_custom_call.1} parent=1 // pred_check_branch
      %227 = sbr.rel (0) target = $region89
    $region88: #{tpu_custom_call.1} parent=1 // pred_region
      _
    $region89: #{tpu_custom_call.1} parent=1 // pred_fallthru
      _
    // Predicated region
    $region90: #{tpu_custom_call.1} parent=1 // pred_check
      _
    $region91: #{tpu_custom_call.1} parent=1 // pred_check_branch
      %229 = sbr.rel (0) target = $region93
    $region92: #{tpu_custom_call.1} parent=1 // pred_region
      %231 = vsyncadd [#allocation24], 0
      %s232 = sshll.u32 %s22, 4
      %s233 = int_to_ptr.hbm [resolvable:$true] %s232
      %s234 = sshll.u32 [#allocation23], 4
      %s235 = int_to_ptr.vmem [resolvable:$true] %s234
      %240 = dma.hbm_to_vmem [thread:$0]  %s233, 1024, %s235, [#allocation24], 64, 64, 4
    $region93: #{tpu_custom_call.1} parent=1 // pred_fallthru
      _
    // Predicated region
    $region94: #{tpu_custom_call.1} parent=1 // pred_check
      _
    $region95: #{tpu_custom_call.1} parent=1 // pred_check_branch
      %242 = sbr.rel (0) target = $region97
    $region96: #{tpu_custom_call.1} parent=1 // pred_region
      _
    $region97: #{tpu_custom_call.1} parent=1 // pred_fallthru
      _
    // Predicated region
    $region98: #{tpu_custom_call.1} parent=1 // pred_check
      _
    $region99: #{tpu_custom_call.1} parent=1 // pred_check_branch
      %244 = sbr.rel (0) target = $region101
    $region100: #{tpu_custom_call.1} parent=1 // pred_region
      %246 = vsyncadd [#allocation24], 0
      %s247 = sshll.u32 %s24, 4
      %s248 = int_to_ptr.hbm [resolvable:$true] %s247
      %s249 = sshll.u32 [#allocation25], 4
      %s250 = int_to_ptr.vmem [resolvable:$true] %s249
      %255 = dma.hbm_to_vmem [thread:$0]  %s248, 1024, %s250, [#allocation24], 64, 64, 4
    $region101: #{tpu_custom_call.1} parent=1 // pred_fallthru
      _
    // Predicated region
    $region102: #{tpu_custom_call.1} parent=1 // pred_check
      _
    $region103: #{tpu_custom_call.1} parent=1 // pred_check_branch
      %257 = sbr.rel (0) target = $region105
    $region104: #{tpu_custom_call.1} parent=1 // pred_region
      _
    $region105: #{tpu_custom_call.1} parent=1 // pred_fallthru
      _
    // Predicated region
    $region106: #{tpu_custom_call.1} parent=1 // pred_check
      _
    $region107: #{tpu_custom_call.1} parent=1 // pred_check_branch
      %259 = sbr.rel (0) target = $region109
    $region108: #{tpu_custom_call.1} parent=1 // pred_region
      _
    $region109: #{tpu_custom_call.1} parent=1 // pred_fallthru
      _
    // Predicated region
    $region110: #{tpu_custom_call.1} parent=1 // pred_check
      _
    $region111: #{tpu_custom_call.1} parent=1 // pred_check_branch
      %261 = sbr.rel (0) target = $region113
    $region112: #{tpu_custom_call.1} parent=1 // pred_region
      _
    $region113: #{tpu_custom_call.1} parent=1 // pred_fallthru
      _
    // Predicated region
    $region114: #{tpu_custom_call.1} parent=1 // pred_check
      _
    $region115: #{tpu_custom_call.1} parent=1 // pred_check_branch
      %263 = sbr.rel (0) target = $region117
    $region116: #{tpu_custom_call.1} parent=1 // pred_region
      %265 = dma.done [#allocation4], 256
    $region117: #{tpu_custom_call.1} parent=1 // pred_fallthru
      _
    // Predicated region
    $region118: #{tpu_custom_call.1} parent=1 // pred_check
      _
    $region119: #{tpu_custom_call.1} parent=1 // pred_check_branch
      %267 = sbr.rel (0) target = $region121
    $region120: #{tpu_custom_call.1} parent=1 // pred_region
      %269 = dma.done [#allocation6], 256
    $region121: #{tpu_custom_call.1} parent=1 // pred_fallthru
      _
    // Predicated region
    $region122: #{tpu_custom_call.1} parent=1 // pred_check
      _
    $region123: #{tpu_custom_call.1} parent=1 // pred_check_branch
      %271 = sbr.rel (0) target = $region125
    $region124: #{tpu_custom_call.1} parent=1 // pred_region
      %273 = dma.done [#allocation6], 128
    $region125: #{tpu_custom_call.1} parent=1 // pred_fallthru
      _
    // Predicated region
    $region126: #{tpu_custom_call.1} parent=1 // pred_check
      _
    $region127: #{tpu_custom_call.1} parent=1 // pred_check_branch
      %275 = sbr.rel (0) target = $region129
    $region128: #{tpu_custom_call.1} parent=1 // pred_region
      %277 = dma.done [#allocation9], 128
    $region129: #{tpu_custom_call.1} parent=1 // pred_fallthru
      _
    // Predicated region
    $region130: #{tpu_custom_call.1} parent=1 // pred_check
      _
    $region131: #{tpu_custom_call.1} parent=1 // pred_check_branch
      %279 = sbr.rel (0) target = $region133
    $region132: #{tpu_custom_call.1} parent=1 // pred_region
      %281 = dma.done [#allocation9], 128
    $region133: #{tpu_custom_call.1} parent=1 // pred_fallthru
      _
    // Predicated region
    $region134: #{tpu_custom_call.1} parent=1 // pred_check
      _
    $region135: #{tpu_custom_call.1} parent=1 // pred_check_branch
      %283 = sbr.rel (0) target = $region137
    $region136: #{tpu_custom_call.1} parent=1 // pred_region
      %285 = dma.done [#allocation12], 128
    $region137: #{tpu_custom_call.1} parent=1 // pred_fallthru
      _
    // Predicated region
    $region138: #{tpu_custom_call.1} parent=1 // pred_check
      _
    $region139: #{tpu_custom_call.1} parent=1 // pred_check_branch
      %287 = sbr.rel (0) target = $region141
    $region140: #{tpu_custom_call.1} parent=1 // pred_region
      %289 = dma.done [#allocation12], 1024
    $region141: #{tpu_custom_call.1} parent=1 // pred_fallthru
      _
    // Predicated region
    $region142: #{tpu_custom_call.1} parent=1 // pred_check
      _
    $region143: #{tpu_custom_call.1} parent=1 // pred_check_branch
      %291 = sbr.rel (0) target = $region145
    $region144: #{tpu_custom_call.1} parent=1 // pred_region
      %293 = dma.done [#allocation15], 1024
    $region145: #{tpu_custom_call.1} parent=1 // pred_fallthru
      _
    // Predicated region
    $region146: #{tpu_custom_call.1} parent=1 // pred_check
      _
    $region147: #{tpu_custom_call.1} parent=1 // pred_check_branch
      %295 = sbr.rel (0) target = $region149
    $region148: #{tpu_custom_call.1} parent=1 // pred_region
      %297 = dma.done [#allocation15], 1024
    $region149: #{tpu_custom_call.1} parent=1 // pred_fallthru
      _
    // Predicated region
    $region150: #{tpu_custom_call.1} parent=1 // pred_check
      _
    $region151: #{tpu_custom_call.1} parent=1 // pred_check_branch
      %299 = sbr.rel (0) target = $region153
    $region152: #{tpu_custom_call.1} parent=1 // pred_region
      %301 = dma.done [#allocation18], 1024
    $region153: #{tpu_custom_call.1} parent=1 // pred_fallthru
      _
    // Predicated region
    $region154: #{tpu_custom_call.1} parent=1 // pred_check
      _
    $region155: #{tpu_custom_call.1} parent=1 // pred_check_branch
      %303 = sbr.rel (0) target = $region157
    $region156: #{tpu_custom_call.1} parent=1 // pred_region
      %305 = dma.done [#allocation18], 1024
    $region157: #{tpu_custom_call.1} parent=1 // pred_fallthru
      _
    // Predicated region
    $region158: #{tpu_custom_call.1} parent=1 // pred_check
      _
    $region159: #{tpu_custom_call.1} parent=1 // pred_check_branch
      %307 = sbr.rel (0) target = $region161
    $region160: #{tpu_custom_call.1} parent=1 // pred_region
      %309 = dma.done [#allocation21], 8192
    $region161: #{tpu_custom_call.1} parent=1 // pred_fallthru
      _
    // Predicated region
    $region162: #{tpu_custom_call.1} parent=1 // pred_check
      _
    $region163: #{tpu_custom_call.1} parent=1 // pred_check_branch
      %311 = sbr.rel (0) target = $region165
    $region164: #{tpu_custom_call.1} parent=1 // pred_region
      %313 = dma.done [#allocation21], 12288
    $region165: #{tpu_custom_call.1} parent=1 // pred_fallthru
      _
    // Predicated region
    $region166: #{tpu_custom_call.1} parent=1 // pred_check
      _
    $region167: #{tpu_custom_call.1} parent=1 // pred_check_branch
      %315 = sbr.rel (0) target = $region169
    $region168: #{tpu_custom_call.1} parent=1 // pred_region
      %317 = dma.done [#allocation24], 1024
    $region169: #{tpu_custom_call.1} parent=1 // pred_fallthru
      _
    // Predicated region
    $region170: #{tpu_custom_call.1} parent=1 // pred_check
      _
    $region171: #{tpu_custom_call.1} parent=1 // pred_check_branch
      %319 = sbr.rel (0) target = $region173
    $region172: #{tpu_custom_call.1} parent=1 // pred_region
      %321 = dma.done [#allocation24], 1024
    $region173: #{tpu_custom_call.1} parent=1 // pred_fallthru
      _
    %v323 = vld [vmem:[#allocation3] sm:$0xff]
    %v324 = vld [vmem:[#allocation3 + $0x8] sm:$0xff]
    %v325 = vld [vmem:[#allocation5] sm:$0xff]
    %v326 = vld [vmem:[#allocation5 + $0x8] sm:$0xff]
    loop: start=0, step=1, limit=26
    $region174: #{tpu_custom_call.1} parent=1 // loop_pre_header
      _
    $region175: #{tpu_custom_call.1} parent=1 // loop_header
      %s328 = sphi 0, %s332
      %p329 = scmp.ge.s32.totalorder %s328, 26
      %v333 = vphi %v323, %v2471
      %v334 = vphi %v324, %v2472
      %v335 = vphi 0.0, %v2467
      %v336 = vphi 0.0, %v2468
      %v337 = vphi %v325, %v1273
      %v338 = vphi %v326, %v1274
      %v339 = vphi 0.0, %v1269
      %v340 = vphi 0.0, %v1270
    $region176: #{tpu_custom_call.1} parent=1 // loop_header_branch
      %331 = sbr.rel (%p329) target = $region180
    $region177: #{tpu_custom_call.1} parent=1 // loop_body
      %v341 = vpack.c.bf16 %v333, %v333
      %v342 = vpack.c.bf16 %v334, %v334
      %v343 = vld [vmem:[%s6] sm:$0xf]
      %v344 = vld [vmem:[%s6 + $0x4] sm:$0xf]
      %v345 = vld [vmem:[%s6 + $0x8] sm:$0xf]
      %v346 = vld [vmem:[%s6 + $0xc] sm:$0xf]
      %v347 = vld [vmem:[%s6 + $0x10] sm:$0xf]
      %v348 = vld [vmem:[%s6 + $0x14] sm:$0xf]
      %v349 = vld [vmem:[%s6 + $0x18] sm:$0xf]
      %v350 = vld [vmem:[%s6 + $0x1c] sm:$0xf]
      %v351 = vld [vmem:[%s6 + $0x20] sm:$0xf]
      %v352 = vld [vmem:[%s6 + $0x24] sm:$0xf]
      %v353 = vld [vmem:[%s6 + $0x28] sm:$0xf]
      %v354 = vld [vmem:[%s6 + $0x2c] sm:$0xf]
      %v355 = vld [vmem:[%s6 + $0x30] sm:$0xf]
      %v356 = vld [vmem:[%s6 + $0x34] sm:$0xf]
      %v357 = vld [vmem:[%s6 + $0x38] sm:$0xf]
      %v358 = vld [vmem:[%s6 + $0x3c] sm:$0xf]
      %v359 = vld [vmem:[%s7] sm:$0x1]
      %v361 = vperm.slane %v359, 0
      %v365 = vunpack.c.l.b16 %v341
      %v366 = vunpack.c.l.b16 %v342
      %v367 = vpack.c.b16 %v366, %v365
      %v385 = vunpack.c.l.b16 %v343
      %v386 = vunpack.c.l.b16 %v344
      %v387 = vunpack.c.l.b16 %v345
      %v388 = vunpack.c.l.b16 %v346
      %v389 = vunpack.c.l.b16 %v347
      %v390 = vunpack.c.l.b16 %v348
      %v391 = vunpack.c.l.b16 %v349
      %v392 = vunpack.c.l.b16 %v350
      %v393 = vunpack.c.l.b16 %v351
      %v394 = vunpack.c.l.b16 %v352
      %v395 = vunpack.c.l.b16 %v353
      %v396 = vunpack.c.l.b16 %v354
      %v397 = vunpack.c.l.b16 %v355
      %v398 = vunpack.c.l.b16 %v356
      %v399 = vunpack.c.l.b16 %v357
      %v400 = vunpack.c.l.b16 %v358
      %v401 = vpack.c.b16 %v386, %v385
      %v402 = vpack.c.b16 %v388, %v387
      %v403 = vpack.c.b16 %v390, %v389
      %v404 = vpack.c.b16 %v392, %v391
      %v405 = vpack.c.b16 %v394, %v393
      %v406 = vpack.c.b16 %v396, %v395
      %v407 = vpack.c.b16 %v398, %v397
      %v408 = vpack.c.b16 %v400, %v399
      %417 = vmatpush.bf16.msra.mxu0 %v408
      %418 = vmatpush.bf16.msra.mxu0 %v407
      %419 = vmatpush.bf16.msra.mxu0 %v406
      %420 = vmatpush.bf16.msra.mxu0 %v405
      %421 = vmatpush.bf16.msra.mxu0 %v404
      %422 = vmatpush.bf16.msra.mxu0 %v403
      %423 = vmatpush.bf16.msra.mxu0 %v402
      %424 = vmatpush.bf16.msra.mxu0 %v401
      %425 = vmatmul.bf16.gmra.mxu0 %v367
      %v426 = vpop.f32.mrf.mxu0
      %v427 = vadd.f32 %v361, %v426
      %v428 = vpop.f32.mrf.mxu0
      %v429 = vadd.f32 %v361, %v428
      %430 = vdwg.mxu0
      %v431 = vmax.f32 %v427, 0.0
      %v432 = vmax.f32 %v429, 0.0
      %v433 = vpack.c.bf16 %v432, %v431
      %v434 = vld [vmem:[#allocation13] sm:$0xf]
      %v435 = vld [vmem:[#allocation13 + $0x4] sm:$0xf]
      %v436 = vld [vmem:[#allocation13 + $0x8] sm:$0xf]
      %v437 = vld [vmem:[#allocation13 + $0xc] sm:$0xf]
      %v438 = vld [vmem:[#allocation13 + $0x10] sm:$0xf]
      %v439 = vld [vmem:[#allocation13 + $0x14] sm:$0xf]
      %v440 = vld [vmem:[#allocation13 + $0x18] sm:$0xf]
      %v441 = vld [vmem:[#allocation13 + $0x1c] sm:$0xf]
      %v442 = vld [vmem:[#allocation13 + $0x20] sm:$0xf]
      %v443 = vld [vmem:[#allocation13 + $0x24] sm:$0xf]
      %v444 = vld [vmem:[#allocation13 + $0x28] sm:$0xf]
      %v445 = vld [vmem:[#allocation13 + $0x2c] sm:$0xf]
      %v446 = vld [vmem:[#allocation13 + $0x30] sm:$0xf]
      %v447 = vld [vmem:[#allocation13 + $0x34] sm:$0xf]
      %v448 = vld [vmem:[#allocation13 + $0x38] sm:$0xf]
      %v449 = vld [vmem:[#allocation13 + $0x3c] sm:$0xf]
      %v450 = vld [vmem:[%s9] sm:$0x1]
      %v452 = vperm.slane %v450, 0
      %v470 = vunpack.c.l.b16 %v434
      %v471 = vunpack.c.l.b16 %v435
      %v472 = vunpack.c.l.b16 %v436
      %v473 = vunpack.c.l.b16 %v437
      %v474 = vunpack.c.l.b16 %v438
      %v475 = vunpack.c.l.b16 %v439
      %v476 = vunpack.c.l.b16 %v440
      %v477 = vunpack.c.l.b16 %v441
      %v478 = vunpack.c.l.b16 %v442
      %v479 = vunpack.c.l.b16 %v443
      %v480 = vunpack.c.l.b16 %v444
      %v481 = vunpack.c.l.b16 %v445
      %v482 = vunpack.c.l.b16 %v446
      %v483 = vunpack.c.l.b16 %v447
      %v484 = vunpack.c.l.b16 %v448
      %v485 = vunpack.c.l.b16 %v449
      %v486 = vpack.c.b16 %v471, %v470
      %v487 = vpack.c.b16 %v473, %v472
      %v488 = vpack.c.b16 %v475, %v474
      %v489 = vpack.c.b16 %v477, %v476
      %v490 = vpack.c.b16 %v479, %v478
      %v491 = vpack.c.b16 %v481, %v480
      %v492 = vpack.c.b16 %v483, %v482
      %v493 = vpack.c.b16 %v485, %v484
      %502 = vmatpush.bf16.msra.mxu0 %v493
      %503 = vmatpush.bf16.msra.mxu0 %v492
      %504 = vmatpush.bf16.msra.mxu0 %v491
      %505 = vmatpush.bf16.msra.mxu0 %v490
      %506 = vmatpush.bf16.msra.mxu0 %v489
      %507 = vmatpush.bf16.msra.mxu0 %v488
      %508 = vmatpush.bf16.msra.mxu0 %v487
      %509 = vmatpush.bf16.msra.mxu0 %v486
      %510 = vmatmul.bf16.gmra.mxu0 %v433
      %v511 = vpop.f32.mrf.mxu0
      %v512 = vadd.f32 %v452, %v511
      %v513 = vpop.f32.mrf.mxu0
      %v514 = vadd.f32 %v452, %v513
      %515 = vdwg.mxu0
      %v516 = vmax.f32 %v512, 0.0
      %v517 = vmax.f32 %v514, 0.0
      %v518 = vpack.c.bf16 %v517, %v516
      %v519 = vld [vmem:[#allocation14] sm:$0xf]
      %v520 = vld [vmem:[#allocation14 + $0x4] sm:$0xf]
      %v521 = vld [vmem:[#allocation14 + $0x8] sm:$0xf]
      %v522 = vld [vmem:[#allocation14 + $0xc] sm:$0xf]
      %v523 = vld [vmem:[#allocation14 + $0x10] sm:$0xf]
      %v524 = vld [vmem:[#allocation14 + $0x14] sm:$0xf]
      %v525 = vld [vmem:[#allocation14 + $0x18] sm:$0xf]
      %v526 = vld [vmem:[#allocation14 + $0x1c] sm:$0xf]
      %v527 = vld [vmem:[#allocation14 + $0x20] sm:$0xf]
      %v528 = vld [vmem:[#allocation14 + $0x24] sm:$0xf]
      %v529 = vld [vmem:[#allocation14 + $0x28] sm:$0xf]
      %v530 = vld [vmem:[#allocation14 + $0x2c] sm:$0xf]
      %v531 = vld [vmem:[#allocation14 + $0x30] sm:$0xf]
      %v532 = vld [vmem:[#allocation14 + $0x34] sm:$0xf]
      %v533 = vld [vmem:[#allocation14 + $0x38] sm:$0xf]
      %v534 = vld [vmem:[#allocation14 + $0x3c] sm:$0xf]
      %v535 = vld [vmem:[%s11] sm:$0x1]
      %v537 = vperm.slane %v535, 0
      %v555 = vunpack.c.l.b16 %v519
      %v556 = vunpack.c.l.b16 %v520
      %v557 = vunpack.c.l.b16 %v521
      %v558 = vunpack.c.l.b16 %v522
      %v559 = vunpack.c.l.b16 %v523
      %v560 = vunpack.c.l.b16 %v524
      %v561 = vunpack.c.l.b16 %v525
      %v562 = vunpack.c.l.b16 %v526
      %v563 = vunpack.c.l.b16 %v527
      %v564 = vunpack.c.l.b16 %v528
      %v565 = vunpack.c.l.b16 %v529
      %v566 = vunpack.c.l.b16 %v530
      %v567 = vunpack.c.l.b16 %v531
      %v568 = vunpack.c.l.b16 %v532
      %v569 = vunpack.c.l.b16 %v533
      %v570 = vunpack.c.l.b16 %v534
      %v571 = vpack.c.b16 %v556, %v555
      %v572 = vpack.c.b16 %v558, %v557
      %v573 = vpack.c.b16 %v560, %v559
      %v574 = vpack.c.b16 %v562, %v561
      %v575 = vpack.c.b16 %v564, %v563
      %v576 = vpack.c.b16 %v566, %v565
      %v577 = vpack.c.b16 %v568, %v567
      %v578 = vpack.c.b16 %v570, %v569
      %587 = vmatpush.bf16.msra.mxu0 %v578
      %588 = vmatpush.bf16.msra.mxu0 %v577
      %589 = vmatpush.bf16.msra.mxu0 %v576
      %590 = vmatpush.bf16.msra.mxu0 %v575
      %591 = vmatpush.bf16.msra.mxu0 %v574
      %592 = vmatpush.bf16.msra.mxu0 %v573
      %593 = vmatpush.bf16.msra.mxu0 %v572
      %594 = vmatpush.bf16.msra.mxu0 %v571
      %595 = vmatmul.bf16.gmra.mxu0 %v518
      %v596 = vpop.f32.mrf.mxu0
      %v597 = vadd.f32 %v537, %v596
      %v598 = vpop.f32.mrf.mxu0
      %v599 = vadd.f32 %v537, %v598
      %600 = vdwg.mxu0
      %v601 = vpack.c.bf16 %v599, %v597
      %v602 = vld [vmem:[#allocation7] sm:$0xf]
      %v603 = vld [vmem:[#allocation7 + $0x4] sm:$0xf]
      %v606 = vunpack.c.l.b16 %v602
      %v607 = vunpack.c.l.b16 %v603
      %v608 = vpack.c.b16 %v607, %v606
      %vm609 = vcmask 130048
      %v611 = vsel %vm609, %v608, 0
      %613 = vmatpush.bf16.msra.mxu0 0
      %614 = vmatpush.bf16.msra.mxu0 0
      %615 = vmatpush.bf16.msra.mxu0 0
      %616 = vmatpush.bf16.msra.mxu0 0
      %617 = vmatpush.bf16.msra.mxu0 0
      %618 = vmatpush.bf16.msra.mxu0 0
      %619 = vmatpush.bf16.msra.mxu0 0
      %620 = vmatpush.bf16.msra.mxu0 %v601
      %621 = vmatmul.bf16.gmra.mxu0 %v611
      %v622 = vpop.f32.mrf.mxu0
      %v623 = vadd.f32 0.0, %v622
      %v624 = vpop.f32.mrf.mxu0
      %v625 = vadd.f32 0.0, %v624
      %626 = vdwg.mxu0
      %v627 = vpack.c.bf16 %v337, %v337
      %v628 = vpack.c.bf16 %v338, %v338
      %v629 = vpack.c.bf16 %v623, %v623
      %v630 = vpack.c.bf16 %v625, %v625
      %v633 = vunpack.c.l.b16 %v627
      %v634 = vunpack.c.l.b16 %v628
      %v635 = vpack.c.b16 %v634, %v633
      %v639 = vunpack.c.l.b16 %v629
      %v640 = vunpack.c.l.b16 %v630
      %v641 = vpack.c.b16 %v640, %v639
      %v643 = vld [vmem:[#allocation20] sm:$0xff]
      %v644 = vld [vmem:[#allocation20 + $0x8] sm:$0xff]
      %v645 = vld [vmem:[#allocation20 + $0x10] sm:$0xff]
      %v646 = vld [vmem:[#allocation20 + $0x18] sm:$0xff]
      %v647 = vld [vmem:[#allocation20 + $0x20] sm:$0xff]
      %v648 = vld [vmem:[#allocation20 + $0x28] sm:$0xff]
      %v649 = vld [vmem:[#allocation20 + $0x30] sm:$0xff]
      %v650 = vld [vmem:[#allocation20 + $0x38] sm:$0xff]
      %v651 = vld [vmem:[#allocation20 + $0x40] sm:$0xff]
      %v652 = vld [vmem:[#allocation20 + $0x48] sm:$0xff]
      %v653 = vld [vmem:[#allocation20 + $0x50] sm:$0xff]
      %v654 = vld [vmem:[#allocation20 + $0x58] sm:$0xff]
      %v655 = vld [vmem:[#allocation20 + $0x60] sm:$0xff]
      %v656 = vld [vmem:[#allocation20 + $0x68] sm:$0xff]
      %v657 = vld [vmem:[#allocation20 + $0x70] sm:$0xff]
      %v658 = vld [vmem:[#allocation20 + $0x78] sm:$0xff]
      %v659 = vld [vmem:[#allocation20 + $0x80] sm:$0xff]
      %v660 = vld [vmem:[#allocation20 + $0x88] sm:$0xff]
      %v661 = vld [vmem:[#allocation20 + $0x90] sm:$0xff]
      %v662 = vld [vmem:[#allocation20 + $0x98] sm:$0xff]
      %v663 = vld [vmem:[#allocation20 + $0xa0] sm:$0xff]
      %v664 = vld [vmem:[#allocation20 + $0xa8] sm:$0xff]
      %v665 = vld [vmem:[#allocation20 + $0xb0] sm:$0xff]
      %v666 = vld [vmem:[#allocation20 + $0xb8] sm:$0xff]
      %v667 = vld [vmem:[#allocation20 + $0xc0] sm:$0xff]
      %v668 = vld [vmem:[#allocation20 + $0xc8] sm:$0xff]
      %v669 = vld [vmem:[#allocation20 + $0xd0] sm:$0xff]
      %v670 = vld [vmem:[#allocation20 + $0xd8] sm:$0xff]
      %v671 = vld [vmem:[#allocation20 + $0xe0] sm:$0xff]
      %v672 = vld [vmem:[#allocation20 + $0xe8] sm:$0xff]
      %v673 = vld [vmem:[#allocation20 + $0xf0] sm:$0xff]
      %v674 = vld [vmem:[#allocation20 + $0xf8] sm:$0xff]
      %v675 = vld [vmem:[#allocation20 + $0x100] sm:$0xff]
      %v676 = vld [vmem:[#allocation20 + $0x108] sm:$0xff]
      %v677 = vld [vmem:[#allocation20 + $0x110] sm:$0xff]
      %v678 = vld [vmem:[#allocation20 + $0x118] sm:$0xff]
      %v679 = vld [vmem:[#allocation20 + $0x120] sm:$0xff]
      %v680 = vld [vmem:[#allocation20 + $0x128] sm:$0xff]
      %v681 = vld [vmem:[#allocation20 + $0x130] sm:$0xff]
      %v682 = vld [vmem:[#allocation20 + $0x138] sm:$0xff]
      %v683 = vld [vmem:[#allocation20 + $0x140] sm:$0xff]
      %v684 = vld [vmem:[#allocation20 + $0x148] sm:$0xff]
      %v685 = vld [vmem:[#allocation20 + $0x150] sm:$0xff]
      %v686 = vld [vmem:[#allocation20 + $0x158] sm:$0xff]
      %v687 = vld [vmem:[#allocation20 + $0x160] sm:$0xff]
      %v688 = vld [vmem:[#allocation20 + $0x168] sm:$0xff]
      %v689 = vld [vmem:[#allocation20 + $0x170] sm:$0xff]
      %v690 = vld [vmem:[#allocation20 + $0x178] sm:$0xff]
      %v691 = vld [vmem:[#allocation20 + $0x180] sm:$0xff]
      %v692 = vld [vmem:[#allocation20 + $0x188] sm:$0xff]
      %v693 = vld [vmem:[#allocation20 + $0x190] sm:$0xff]
      %v694 = vld [vmem:[#allocation20 + $0x198] sm:$0xff]
      %v695 = vld [vmem:[#allocation20 + $0x1a0] sm:$0xff]
      %v696 = vld [vmem:[#allocation20 + $0x1a8] sm:$0xff]
      %v697 = vld [vmem:[#allocation20 + $0x1b0] sm:$0xff]
      %v698 = vld [vmem:[#allocation20 + $0x1b8] sm:$0xff]
      %v699 = vld [vmem:[#allocation20 + $0x1c0] sm:$0xff]
      %v700 = vld [vmem:[#allocation20 + $0x1c8] sm:$0xff]
      %v701 = vld [vmem:[#allocation20 + $0x1d0] sm:$0xff]
      %v702 = vld [vmem:[#allocation20 + $0x1d8] sm:$0xff]
      %v703 = vld [vmem:[#allocation20 + $0x1e0] sm:$0xff]
      %v704 = vld [vmem:[#allocation20 + $0x1e8] sm:$0xff]
      %v705 = vld [vmem:[#allocation20 + $0x1f0] sm:$0xff]
      %v706 = vld [vmem:[#allocation20 + $0x1f8] sm:$0xff]
      %v707 = vld [vmem:[%s19] sm:$0xf]
      %v709 = vperm.slane %v707, 0
      %v710 = vperm.slane %v707, 1
      %v711 = vperm.slane %v707, 2
      %v712 = vperm.slane %v707, 3
      %v781 = vunpack.c.l.b16 %v643
      %v782 = vunpack.c.h.b16 %v643
      %v783 = vunpack.c.l.b16 %v644
      %v784 = vunpack.c.h.b16 %v644
      %v785 = vunpack.c.l.b16 %v645
      %v786 = vunpack.c.h.b16 %v645
      %v787 = vunpack.c.l.b16 %v646
      %v788 = vunpack.c.h.b16 %v646
      %v789 = vunpack.c.l.b16 %v647
      %v790 = vunpack.c.h.b16 %v647
      %v791 = vunpack.c.l.b16 %v648
      %v792 = vunpack.c.h.b16 %v648
      %v793 = vunpack.c.l.b16 %v649
      %v794 = vunpack.c.h.b16 %v649
      %v795 = vunpack.c.l.b16 %v650
      %v796 = vunpack.c.h.b16 %v650
      %v797 = vunpack.c.l.b16 %v651
      %v798 = vunpack.c.h.b16 %v651
      %v799 = vunpack.c.l.b16 %v652
      %v800 = vunpack.c.h.b16 %v652
      %v801 = vunpack.c.l.b16 %v653
      %v802 = vunpack.c.h.b16 %v653
      %v803 = vunpack.c.l.b16 %v654
      %v804 = vunpack.c.h.b16 %v654
      %v805 = vunpack.c.l.b16 %v655
      %v806 = vunpack.c.h.b16 %v655
      %v807 = vunpack.c.l.b16 %v656
      %v808 = vunpack.c.h.b16 %v656
      %v809 = vunpack.c.l.b16 %v657
      %v810 = vunpack.c.h.b16 %v657
      %v811 = vunpack.c.l.b16 %v658
      %v812 = vunpack.c.h.b16 %v658
      %v813 = vunpack.c.l.b16 %v659
      %v814 = vunpack.c.h.b16 %v659
      %v815 = vunpack.c.l.b16 %v660
      %v816 = vunpack.c.h.b16 %v660
      %v817 = vunpack.c.l.b16 %v661
      %v818 = vunpack.c.h.b16 %v661
      %v819 = vunpack.c.l.b16 %v662
      %v820 = vunpack.c.h.b16 %v662
      %v821 = vunpack.c.l.b16 %v663
      %v822 = vunpack.c.h.b16 %v663
      %v823 = vunpack.c.l.b16 %v664
      %v824 = vunpack.c.h.b16 %v664
      %v825 = vunpack.c.l.b16 %v665
      %v826 = vunpack.c.h.b16 %v665
      %v827 = vunpack.c.l.b16 %v666
      %v828 = vunpack.c.h.b16 %v666
      %v829 = vunpack.c.l.b16 %v667
      %v830 = vunpack.c.h.b16 %v667
      %v831 = vunpack.c.l.b16 %v668
      %v832 = vunpack.c.h.b16 %v668
      %v833 = vunpack.c.l.b16 %v669
      %v834 = vunpack.c.h.b16 %v669
      %v835 = vunpack.c.l.b16 %v670
      %v836 = vunpack.c.h.b16 %v670
      %v837 = vunpack.c.l.b16 %v671
      %v838 = vunpack.c.h.b16 %v671
      %v839 = vunpack.c.l.b16 %v672
      %v840 = vunpack.c.h.b16 %v672
      %v841 = vunpack.c.l.b16 %v673
      %v842 = vunpack.c.h.b16 %v673
      %v843 = vunpack.c.l.b16 %v674
      %v844 = vunpack.c.h.b16 %v674
      %v845 = vunpack.c.l.b16 %v675
      %v846 = vunpack.c.h.b16 %v675
      %v847 = vunpack.c.l.b16 %v676
      %v848 = vunpack.c.h.b16 %v676
      %v849 = vunpack.c.l.b16 %v677
      %v850 = vunpack.c.h.b16 %v677
      %v851 = vunpack.c.l.b16 %v678
      %v852 = vunpack.c.h.b16 %v678
      %v853 = vunpack.c.l.b16 %v679
      %v854 = vunpack.c.h.b16 %v679
      %v855 = vunpack.c.l.b16 %v680
      %v856 = vunpack.c.h.b16 %v680
      %v857 = vunpack.c.l.b16 %v681
      %v858 = vunpack.c.h.b16 %v681
      %v859 = vunpack.c.l.b16 %v682
      %v860 = vunpack.c.h.b16 %v682
      %v861 = vunpack.c.l.b16 %v683
      %v862 = vunpack.c.h.b16 %v683
      %v863 = vunpack.c.l.b16 %v684
      %v864 = vunpack.c.h.b16 %v684
      %v865 = vunpack.c.l.b16 %v685
      %v866 = vunpack.c.h.b16 %v685
      %v867 = vunpack.c.l.b16 %v686
      %v868 = vunpack.c.h.b16 %v686
      %v869 = vunpack.c.l.b16 %v687
      %v870 = vunpack.c.h.b16 %v687
      %v871 = vunpack.c.l.b16 %v688
      %v872 = vunpack.c.h.b16 %v688
      %v873 = vunpack.c.l.b16 %v689
      %v874 = vunpack.c.h.b16 %v689
      %v875 = vunpack.c.l.b16 %v690
      %v876 = vunpack.c.h.b16 %v690
      %v877 = vunpack.c.l.b16 %v691
      %v878 = vunpack.c.h.b16 %v691
      %v879 = vunpack.c.l.b16 %v692
      %v880 = vunpack.c.h.b16 %v692
      %v881 = vunpack.c.l.b16 %v693
      %v882 = vunpack.c.h.b16 %v693
      %v883 = vunpack.c.l.b16 %v694
      %v884 = vunpack.c.h.b16 %v694
      %v885 = vunpack.c.l.b16 %v695
      %v886 = vunpack.c.h.b16 %v695
      %v887 = vunpack.c.l.b16 %v696
      %v888 = vunpack.c.h.b16 %v696
      %v889 = vunpack.c.l.b16 %v697
      %v890 = vunpack.c.h.b16 %v697
      %v891 = vunpack.c.l.b16 %v698
      %v892 = vunpack.c.h.b16 %v698
      %v893 = vunpack.c.l.b16 %v699
      %v894 = vunpack.c.h.b16 %v699
      %v895 = vunpack.c.l.b16 %v700
      %v896 = vunpack.c.h.b16 %v700
      %v897 = vunpack.c.l.b16 %v701
      %v898 = vunpack.c.h.b16 %v701
      %v899 = vunpack.c.l.b16 %v702
      %v900 = vunpack.c.h.b16 %v702
      %v901 = vunpack.c.l.b16 %v703
      %v902 = vunpack.c.h.b16 %v703
      %v903 = vunpack.c.l.b16 %v704
      %v904 = vunpack.c.h.b16 %v704
      %v905 = vunpack.c.l.b16 %v705
      %v906 = vunpack.c.h.b16 %v705
      %v907 = vunpack.c.l.b16 %v706
      %v908 = vunpack.c.h.b16 %v706
      %v909 = vpack.c.b16 %v785, %v781
      %v910 = vpack.c.b16 %v786, %v782
      %v911 = vpack.c.b16 %v787, %v783
      %v912 = vpack.c.b16 %v788, %v784
      %v913 = vpack.c.b16 %v793, %v789
      %v914 = vpack.c.b16 %v794, %v790
      %v915 = vpack.c.b16 %v795, %v791
      %v916 = vpack.c.b16 %v796, %v792
      %v917 = vpack.c.b16 %v801, %v797
      %v918 = vpack.c.b16 %v802, %v798
      %v919 = vpack.c.b16 %v803, %v799
      %v920 = vpack.c.b16 %v804, %v800
      %v921 = vpack.c.b16 %v809, %v805
      %v922 = vpack.c.b16 %v810, %v806
      %v923 = vpack.c.b16 %v811, %v807
      %v924 = vpack.c.b16 %v812, %v808
      %v925 = vpack.c.b16 %v817, %v813
      %v926 = vpack.c.b16 %v818, %v814
      %v927 = vpack.c.b16 %v819, %v815
      %v928 = vpack.c.b16 %v820, %v816
      %v929 = vpack.c.b16 %v825, %v821
      %v930 = vpack.c.b16 %v826, %v822
      %v931 = vpack.c.b16 %v827, %v823
      %v932 = vpack.c.b16 %v828, %v824
      %v933 = vpack.c.b16 %v833, %v829
      %v934 = vpack.c.b16 %v834, %v830
      %v935 = vpack.c.b16 %v835, %v831
      %v936 = vpack.c.b16 %v836, %v832
      %v937 = vpack.c.b16 %v841, %v837
      %v938 = vpack.c.b16 %v842, %v838
      %v939 = vpack.c.b16 %v843, %v839
      %v940 = vpack.c.b16 %v844, %v840
      %v941 = vpack.c.b16 %v849, %v845
      %v942 = vpack.c.b16 %v850, %v846
      %v943 = vpack.c.b16 %v851, %v847
      %v944 = vpack.c.b16 %v852, %v848
      %v945 = vpack.c.b16 %v857, %v853
      %v946 = vpack.c.b16 %v858, %v854
      %v947 = vpack.c.b16 %v859, %v855
      %v948 = vpack.c.b16 %v860, %v856
      %v949 = vpack.c.b16 %v865, %v861
      %v950 = vpack.c.b16 %v866, %v862
      %v951 = vpack.c.b16 %v867, %v863
      %v952 = vpack.c.b16 %v868, %v864
      %v953 = vpack.c.b16 %v873, %v869
      %v954 = vpack.c.b16 %v874, %v870
      %v955 = vpack.c.b16 %v875, %v871
      %v956 = vpack.c.b16 %v876, %v872
      %v957 = vpack.c.b16 %v881, %v877
      %v958 = vpack.c.b16 %v882, %v878
      %v959 = vpack.c.b16 %v883, %v879
      %v960 = vpack.c.b16 %v884, %v880
      %v961 = vpack.c.b16 %v889, %v885
      %v962 = vpack.c.b16 %v890, %v886
      %v963 = vpack.c.b16 %v891, %v887
      %v964 = vpack.c.b16 %v892, %v888
      %v965 = vpack.c.b16 %v897, %v893
      %v966 = vpack.c.b16 %v898, %v894
      %v967 = vpack.c.b16 %v899, %v895
      %v968 = vpack.c.b16 %v900, %v896
      %v969 = vpack.c.b16 %v905, %v901
      %v970 = vpack.c.b16 %v906, %v902
      %v971 = vpack.c.b16 %v907, %v903
      %v972 = vpack.c.b16 %v908, %v904
      %1037 = vmatpush.bf16.msra.mxu0 %v937
      %1038 = vmatpush.bf16.msra.mxu0 %v933
      %1039 = vmatpush.bf16.msra.mxu0 %v929
      %1040 = vmatpush.bf16.msra.mxu0 %v925
      %1041 = vmatpush.bf16.msra.mxu0 %v921
      %1042 = vmatpush.bf16.msra.mxu0 %v917
      %1043 = vmatpush.bf16.msra.mxu0 %v913
      %1044 = vmatpush.bf16.msra.mxu0 %v909
      %1045 = vmatmul.bf16.gmra.mxu0 %v635
      %v1046 = vpop.f32.mrf.mxu0
      %v1047 = vadd.f32 %v709, %v1046
      %v1048 = vpop.f32.mrf.mxu0
      %v1049 = vadd.f32 %v709, %v1048
      %1050 = vdwg.mxu0
      %1051 = vmatpush.bf16.msra.mxu0 %v969
      %1052 = vmatpush.bf16.msra.mxu0 %v965
      %1053 = vmatpush.bf16.msra.mxu0 %v961
      %1054 = vmatpush.bf16.msra.mxu0 %v957
      %1055 = vmatpush.bf16.msra.mxu0 %v953
      %1056 = vmatpush.bf16.msra.mxu0 %v949
      %1057 = vmatpush.bf16.msra.mxu0 %v945
      %1058 = vmatpush.bf16.msra.mxu0 %v941
      %1059 = vmatmul.bf16.gmra.mxu0 %v641
      %v1060 = vpop.f32.mrf.mxu0
      %v1061 = vadd.f32 %v1047, %v1060
      %v1062 = vpop.f32.mrf.mxu0
      %v1063 = vadd.f32 %v1049, %v1062
      %1064 = vdwg.mxu0
      %1065 = vmatpush.bf16.msra.mxu0 %v938
      %1066 = vmatpush.bf16.msra.mxu0 %v934
      %1067 = vmatpush.bf16.msra.mxu0 %v930
      %1068 = vmatpush.bf16.msra.mxu0 %v926
      %1069 = vmatpush.bf16.msra.mxu0 %v922
      %1070 = vmatpush.bf16.msra.mxu0 %v918
      %1071 = vmatpush.bf16.msra.mxu0 %v914
      %1072 = vmatpush.bf16.msra.mxu0 %v910
      %1073 = vmatmul.bf16.gmra.mxu0 %v635
      %v1074 = vpop.f32.mrf.mxu0
      %v1075 = vadd.f32 %v710, %v1074
      %v1076 = vpop.f32.mrf.mxu0
      %v1077 = vadd.f32 %v710, %v1076
      %1078 = vdwg.mxu0
      %1079 = vmatpush.bf16.msra.mxu0 %v970
      %1080 = vmatpush.bf16.msra.mxu0 %v966
      %1081 = vmatpush.bf16.msra.mxu0 %v962
      %1082 = vmatpush.bf16.msra.mxu0 %v958
      %1083 = vmatpush.bf16.msra.mxu0 %v954
      %1084 = vmatpush.bf16.msra.mxu0 %v950
      %1085 = vmatpush.bf16.msra.mxu0 %v946
      %1086 = vmatpush.bf16.msra.mxu0 %v942
      %1087 = vmatmul.bf16.gmra.mxu0 %v641
      %v1088 = vpop.f32.mrf.mxu0
      %v1089 = vadd.f32 %v1075, %v1088
      %v1090 = vpop.f32.mrf.mxu0
      %v1091 = vadd.f32 %v1077, %v1090
      %1092 = vdwg.mxu0
      %1093 = vmatpush.bf16.msra.mxu0 %v939
      %1094 = vmatpush.bf16.msra.mxu0 %v935
      %1095 = vmatpush.bf16.msra.mxu0 %v931
      %1096 = vmatpush.bf16.msra.mxu0 %v927
      %1097 = vmatpush.bf16.msra.mxu0 %v923
      %1098 = vmatpush.bf16.msra.mxu0 %v919
      %1099 = vmatpush.bf16.msra.mxu0 %v915
      %1100 = vmatpush.bf16.msra.mxu0 %v911
      %1101 = vmatmul.bf16.gmra.mxu0 %v635
      %v1102 = vpop.f32.mrf.mxu0
      %v1103 = vadd.f32 %v711, %v1102
      %v1104 = vpop.f32.mrf.mxu0
      %v1105 = vadd.f32 %v711, %v1104
      %1106 = vdwg.mxu0
      %1107 = vmatpush.bf16.msra.mxu0 %v971
      %1108 = vmatpush.bf16.msra.mxu0 %v967
      %1109 = vmatpush.bf16.msra.mxu0 %v963
      %1110 = vmatpush.bf16.msra.mxu0 %v959
      %1111 = vmatpush.bf16.msra.mxu0 %v955
      %1112 = vmatpush.bf16.msra.mxu0 %v951
      %1113 = vmatpush.bf16.msra.mxu0 %v947
      %1114 = vmatpush.bf16.msra.mxu0 %v943
      %1115 = vmatmul.bf16.gmra.mxu0 %v641
      %v1116 = vpop.f32.mrf.mxu0
      %v1117 = vadd.f32 %v1103, %v1116
      %v1118 = vpop.f32.mrf.mxu0
      %v1119 = vadd.f32 %v1105, %v1118
      %1120 = vdwg.mxu0
      %1121 = vmatpush.bf16.msra.mxu0 %v940
      %1122 = vmatpush.bf16.msra.mxu0 %v936
      %1123 = vmatpush.bf16.msra.mxu0 %v932
      %1124 = vmatpush.bf16.msra.mxu0 %v928
      %1125 = vmatpush.bf16.msra.mxu0 %v924
      %1126 = vmatpush.bf16.msra.mxu0 %v920
      %1127 = vmatpush.bf16.msra.mxu0 %v916
      %1128 = vmatpush.bf16.msra.mxu0 %v912
      %1129 = vmatmul.bf16.gmra.mxu0 %v635
      %v1130 = vpop.f32.mrf.mxu0
      %v1131 = vadd.f32 %v712, %v1130
      %v1132 = vpop.f32.mrf.mxu0
      %v1133 = vadd.f32 %v712, %v1132
      %1134 = vdwg.mxu0
      %1135 = vmatpush.bf16.msra.mxu0 %v972
      %1136 = vmatpush.bf16.msra.mxu0 %v968
      %1137 = vmatpush.bf16.msra.mxu0 %v964
      %1138 = vmatpush.bf16.msra.mxu0 %v960
      %1139 = vmatpush.bf16.msra.mxu0 %v956
      %1140 = vmatpush.bf16.msra.mxu0 %v952
      %1141 = vmatpush.bf16.msra.mxu0 %v948
      %1142 = vmatpush.bf16.msra.mxu0 %v944
      %1143 = vmatmul.bf16.gmra.mxu0 %v641
      %v1144 = vpop.f32.mrf.mxu0
      %v1145 = vadd.f32 %v1131, %v1144
      %v1146 = vpop.f32.mrf.mxu0
      %v1147 = vadd.f32 %v1133, %v1146
      %1148 = vdwg.mxu0
      %v1149 = vxor.u32 %v1061, 2147483648
      %v1150 = vxor.u32 %v1063, 2147483648
      %v1151 = vmul.f32 %v1149, 1.442695
      %v1152 = vpow.pop %v1151
      %v1153 = vmul.f32 %v1150, 1.442695
      %v1154 = vpow.pop %v1153
      %v1155 = vadd.f32 %v1152, 1.0
      %v1156 = vadd.f32 %v1154, 1.0
      %v1157 = vrcp.pop %v1155
      %v1158 = vmul.f32 %v1155, %v1157
      %v1159 = vsub.f32 1.0, %v1158
      %v1160 = vmul.f32 %v1157, %v1159
      %v1161 = vadd.f32 %v1157, %v1160
      %vm1162 = vweird.f32 %v1155
      %vm1163 = vweird.f32 %v1157
      %vm1164 = vmor %vm1162, %vm1163
      %v1165 = vsel %vm1164, %v1157, %v1161
      %v1166 = vand.u32 2147483647, %v1155
      %vm1167 = vcmp.eq.f32.partialorder %v1166, 8.507059e+37
      %v1168 = vand.u32 %v1155, 2147483648
      %v1169 = vor.u32 1.1754944e-38, %v1168
      %v1170 = vsel %vm1167, %v1169, %v1165
      %v1171 = vmul.f32 1.0, %v1170
      %v1172 = vrcp.pop %v1156
      %v1173 = vmul.f32 %v1156, %v1172
      %v1174 = vsub.f32 1.0, %v1173
      %v1175 = vmul.f32 %v1172, %v1174
      %v1176 = vadd.f32 %v1172, %v1175
      %vm1177 = vweird.f32 %v1156
      %vm1178 = vweird.f32 %v1172
      %vm1179 = vmor %vm1177, %vm1178
      %v1180 = vsel %vm1179, %v1172, %v1176
      %v1181 = vand.u32 2147483647, %v1156
      %vm1182 = vcmp.eq.f32.partialorder %v1181, 8.507059e+37
      %v1183 = vand.u32 %v1156, 2147483648
      %v1184 = vor.u32 1.1754944e-38, %v1183
      %v1185 = vsel %vm1182, %v1184, %v1180
      %v1186 = vmul.f32 1.0, %v1185
      %v1187 = vxor.u32 %v1089, 2147483648
      %v1188 = vxor.u32 %v1091, 2147483648
      %v1189 = vmul.f32 %v1187, 1.442695
      %v1190 = vpow.pop %v1189
      %v1191 = vmul.f32 %v1188, 1.442695
      %v1192 = vpow.pop %v1191
      %v1193 = vadd.f32 %v1190, 1.0
      %v1194 = vadd.f32 %v1192, 1.0
      %v1195 = vrcp.pop %v1193
      %v1196 = vmul.f32 %v1193, %v1195
      %v1197 = vsub.f32 1.0, %v1196
      %v1198 = vmul.f32 %v1195, %v1197
      %v1199 = vadd.f32 %v1195, %v1198
      %vm1200 = vweird.f32 %v1193
      %vm1201 = vweird.f32 %v1195
      %vm1202 = vmor %vm1200, %vm1201
      %v1203 = vsel %vm1202, %v1195, %v1199
      %v1204 = vand.u32 2147483647, %v1193
      %vm1205 = vcmp.eq.f32.partialorder %v1204, 8.507059e+37
      %v1206 = vand.u32 %v1193, 2147483648
      %v1207 = vor.u32 1.1754944e-38, %v1206
      %v1208 = vsel %vm1205, %v1207, %v1203
      %v1209 = vmul.f32 1.0, %v1208
      %v1210 = vrcp.pop %v1194
      %v1211 = vmul.f32 %v1194, %v1210
      %v1212 = vsub.f32 1.0, %v1211
      %v1213 = vmul.f32 %v1210, %v1212
      %v1214 = vadd.f32 %v1210, %v1213
      %vm1215 = vweird.f32 %v1194
      %vm1216 = vweird.f32 %v1210
      %vm1217 = vmor %vm1215, %vm1216
      %v1218 = vsel %vm1217, %v1210, %v1214
      %v1219 = vand.u32 2147483647, %v1194
      %vm1220 = vcmp.eq.f32.partialorder %v1219, 8.507059e+37
      %v1221 = vand.u32 %v1194, 2147483648
      %v1222 = vor.u32 1.1754944e-38, %v1221
      %v1223 = vsel %vm1220, %v1222, %v1218
      %v1224 = vmul.f32 1.0, %v1223
      %v1225 = vtanh.pop %v1117
      %v1226 = vtanh.pop %v1119
      %v1227 = vxor.u32 %v1145, 2147483648
      %v1228 = vxor.u32 %v1147, 2147483648
      %v1229 = vmul.f32 %v1227, 1.442695
      %v1230 = vpow.pop %v1229
      %v1231 = vmul.f32 %v1228, 1.442695
      %v1232 = vpow.pop %v1231
      %v1233 = vadd.f32 %v1230, 1.0
      %v1234 = vadd.f32 %v1232, 1.0
      %v1235 = vrcp.pop %v1233
      %v1236 = vmul.f32 %v1233, %v1235
      %v1237 = vsub.f32 1.0, %v1236
      %v1238 = vmul.f32 %v1235, %v1237
      %v1239 = vadd.f32 %v1235, %v1238
      %vm1240 = vweird.f32 %v1233
      %vm1241 = vweird.f32 %v1235
      %vm1242 = vmor %vm1240, %vm1241
      %v1243 = vsel %vm1242, %v1235, %v1239
      %v1244 = vand.u32 2147483647, %v1233
      %vm1245 = vcmp.eq.f32.partialorder %v1244, 8.507059e+37
      %v1246 = vand.u32 %v1233, 2147483648
      %v1247 = vor.u32 1.1754944e-38, %v1246
      %v1248 = vsel %vm1245, %v1247, %v1243
      %v1249 = vmul.f32 1.0, %v1248
      %v1250 = vrcp.pop %v1234
      %v1251 = vmul.f32 %v1234, %v1250
      %v1252 = vsub.f32 1.0, %v1251
      %v1253 = vmul.f32 %v1250, %v1252
      %v1254 = vadd.f32 %v1250, %v1253
      %vm1255 = vweird.f32 %v1234
      %vm1256 = vweird.f32 %v1250
      %vm1257 = vmor %vm1255, %vm1256
      %v1258 = vsel %vm1257, %v1250, %v1254
      %v1259 = vand.u32 2147483647, %v1234
      %vm1260 = vcmp.eq.f32.partialorder %v1259, 8.507059e+37
      %v1261 = vand.u32 %v1234, 2147483648
      %v1262 = vor.u32 1.1754944e-38, %v1261
      %v1263 = vsel %vm1260, %v1262, %v1258
      %v1264 = vmul.f32 1.0, %v1263
      %v1265 = vmul.f32 %v1209, %v339
      %v1266 = vmul.f32 %v1224, %v340
      %v1267 = vmul.f32 %v1171, %v1225
      %v1268 = vmul.f32 %v1186, %v1226
      %v1269 = vadd.f32 %v1265, %v1267
      %v1270 = vadd.f32 %v1266, %v1268
      %v1271 = vtanh.pop %v1269
      %v1272 = vtanh.pop %v1270
      %v1273 = vmul.f32 %v1249, %v1271
      %v1274 = vmul.f32 %v1264, %v1272
      %v1275 = vpack.c.bf16 %v1274, %v1273
      %v1276 = vld [vmem:[#allocation16] sm:$0xf]
      %v1277 = vld [vmem:[#allocation16 + $0x4] sm:$0xf]
      %v1278 = vld [vmem:[#allocation16 + $0x8] sm:$0xf]
      %v1279 = vld [vmem:[#allocation16 + $0xc] sm:$0xf]
      %v1280 = vld [vmem:[#allocation16 + $0x10] sm:$0xf]
      %v1281 = vld [vmem:[#allocation16 + $0x14] sm:$0xf]
      %v1282 = vld [vmem:[#allocation16 + $0x18] sm:$0xf]
      %v1283 = vld [vmem:[#allocation16 + $0x1c] sm:$0xf]
      %v1284 = vld [vmem:[#allocation16 + $0x20] sm:$0xf]
      %v1285 = vld [vmem:[#allocation16 + $0x24] sm:$0xf]
      %v1286 = vld [vmem:[#allocation16 + $0x28] sm:$0xf]
      %v1287 = vld [vmem:[#allocation16 + $0x2c] sm:$0xf]
      %v1288 = vld [vmem:[#allocation16 + $0x30] sm:$0xf]
      %v1289 = vld [vmem:[#allocation16 + $0x34] sm:$0xf]
      %v1290 = vld [vmem:[#allocation16 + $0x38] sm:$0xf]
      %v1291 = vld [vmem:[#allocation16 + $0x3c] sm:$0xf]
      %v1292 = vld [vmem:[%s13] sm:$0x1]
      %v1294 = vperm.slane %v1292, 0
      %v1312 = vunpack.c.l.b16 %v1276
      %v1313 = vunpack.c.l.b16 %v1277
      %v1314 = vunpack.c.l.b16 %v1278
      %v1315 = vunpack.c.l.b16 %v1279
      %v1316 = vunpack.c.l.b16 %v1280
      %v1317 = vunpack.c.l.b16 %v1281
      %v1318 = vunpack.c.l.b16 %v1282
      %v1319 = vunpack.c.l.b16 %v1283
      %v1320 = vunpack.c.l.b16 %v1284
      %v1321 = vunpack.c.l.b16 %v1285
      %v1322 = vunpack.c.l.b16 %v1286
      %v1323 = vunpack.c.l.b16 %v1287
      %v1324 = vunpack.c.l.b16 %v1288
      %v1325 = vunpack.c.l.b16 %v1289
      %v1326 = vunpack.c.l.b16 %v1290
      %v1327 = vunpack.c.l.b16 %v1291
      %v1328 = vpack.c.b16 %v1313, %v1312
      %v1329 = vpack.c.b16 %v1315, %v1314
      %v1330 = vpack.c.b16 %v1317, %v1316
      %v1331 = vpack.c.b16 %v1319, %v1318
      %v1332 = vpack.c.b16 %v1321, %v1320
      %v1333 = vpack.c.b16 %v1323, %v1322
      %v1334 = vpack.c.b16 %v1325, %v1324
      %v1335 = vpack.c.b16 %v1327, %v1326
      %1344 = vmatpush.bf16.msra.mxu0 %v1335
      %1345 = vmatpush.bf16.msra.mxu0 %v1334
      %1346 = vmatpush.bf16.msra.mxu0 %v1333
      %1347 = vmatpush.bf16.msra.mxu0 %v1332
      %1348 = vmatpush.bf16.msra.mxu0 %v1331
      %1349 = vmatpush.bf16.msra.mxu0 %v1330
      %1350 = vmatpush.bf16.msra.mxu0 %v1329
      %1351 = vmatpush.bf16.msra.mxu0 %v1328
      %1352 = vmatmul.bf16.gmra.mxu0 %v1275
      %v1353 = vpop.f32.mrf.mxu0
      %v1354 = vadd.f32 %v1294, %v1353
      %v1355 = vpop.f32.mrf.mxu0
      %v1356 = vadd.f32 %v1294, %v1355
      %1357 = vdwg.mxu0
      %v1358 = vmax.f32 %v1354, 0.0
      %v1359 = vmax.f32 %v1356, 0.0
      %v1360 = vpack.c.bf16 %v1359, %v1358
      %v1361 = vld [vmem:[#allocation17] sm:$0xf]
      %v1362 = vld [vmem:[#allocation17 + $0x4] sm:$0xf]
      %v1363 = vld [vmem:[#allocation17 + $0x8] sm:$0xf]
      %v1364 = vld [vmem:[#allocation17 + $0xc] sm:$0xf]
      %v1365 = vld [vmem:[#allocation17 + $0x10] sm:$0xf]
      %v1366 = vld [vmem:[#allocation17 + $0x14] sm:$0xf]
      %v1367 = vld [vmem:[#allocation17 + $0x18] sm:$0xf]
      %v1368 = vld [vmem:[#allocation17 + $0x1c] sm:$0xf]
      %v1369 = vld [vmem:[#allocation17 + $0x20] sm:$0xf]
      %v1370 = vld [vmem:[#allocation17 + $0x24] sm:$0xf]
      %v1371 = vld [vmem:[#allocation17 + $0x28] sm:$0xf]
      %v1372 = vld [vmem:[#allocation17 + $0x2c] sm:$0xf]
      %v1373 = vld [vmem:[#allocation17 + $0x30] sm:$0xf]
      %v1374 = vld [vmem:[#allocation17 + $0x34] sm:$0xf]
      %v1375 = vld [vmem:[#allocation17 + $0x38] sm:$0xf]
      %v1376 = vld [vmem:[#allocation17 + $0x3c] sm:$0xf]
      %v1377 = vld [vmem:[%s15] sm:$0x1]
      %v1379 = vperm.slane %v1377, 0
      %v1397 = vunpack.c.l.b16 %v1361
      %v1398 = vunpack.c.l.b16 %v1362
      %v1399 = vunpack.c.l.b16 %v1363
      %v1400 = vunpack.c.l.b16 %v1364
      %v1401 = vunpack.c.l.b16 %v1365
      %v1402 = vunpack.c.l.b16 %v1366
      %v1403 = vunpack.c.l.b16 %v1367
      %v1404 = vunpack.c.l.b16 %v1368
      %v1405 = vunpack.c.l.b16 %v1369
      %v1406 = vunpack.c.l.b16 %v1370
      %v1407 = vunpack.c.l.b16 %v1371
      %v1408 = vunpack.c.l.b16 %v1372
      %v1409 = vunpack.c.l.b16 %v1373
      %v1410 = vunpack.c.l.b16 %v1374
      %v1411 = vunpack.c.l.b16 %v1375
      %v1412 = vunpack.c.l.b16 %v1376
      %v1413 = vpack.c.b16 %v1398, %v1397
      %v1414 = vpack.c.b16 %v1400, %v1399
      %v1415 = vpack.c.b16 %v1402, %v1401
      %v1416 = vpack.c.b16 %v1404, %v1403
      %v1417 = vpack.c.b16 %v1406, %v1405
      %v1418 = vpack.c.b16 %v1408, %v1407
      %v1419 = vpack.c.b16 %v1410, %v1409
      %v1420 = vpack.c.b16 %v1412, %v1411
      %1429 = vmatpush.bf16.msra.mxu0 %v1420
      %1430 = vmatpush.bf16.msra.mxu0 %v1419
      %1431 = vmatpush.bf16.msra.mxu0 %v1418
      %1432 = vmatpush.bf16.msra.mxu0 %v1417
      %1433 = vmatpush.bf16.msra.mxu0 %v1416
      %1434 = vmatpush.bf16.msra.mxu0 %v1415
      %1435 = vmatpush.bf16.msra.mxu0 %v1414
      %1436 = vmatpush.bf16.msra.mxu0 %v1413
      %1437 = vmatmul.bf16.gmra.mxu0 %v1360
      %v1438 = vpop.f32.mrf.mxu0
      %v1439 = vadd.f32 %v1379, %v1438
      %v1440 = vpop.f32.mrf.mxu0
      %v1441 = vadd.f32 %v1379, %v1440
      %1442 = vdwg.mxu0
      %v1443 = vmax.f32 %v1439, 0.0
      %v1444 = vmax.f32 %v1441, 0.0
      %v1445 = vpack.c.bf16 %v1444, %v1443
      %v1446 = vld [vmem:[#allocation19] sm:$0xf]
      %v1447 = vld [vmem:[#allocation19 + $0x4] sm:$0xf]
      %v1448 = vld [vmem:[#allocation19 + $0x8] sm:$0xf]
      %v1449 = vld [vmem:[#allocation19 + $0xc] sm:$0xf]
      %v1450 = vld [vmem:[#allocation19 + $0x10] sm:$0xf]
      %v1451 = vld [vmem:[#allocation19 + $0x14] sm:$0xf]
      %v1452 = vld [vmem:[#allocation19 + $0x18] sm:$0xf]
      %v1453 = vld [vmem:[#allocation19 + $0x1c] sm:$0xf]
      %v1454 = vld [vmem:[#allocation19 + $0x20] sm:$0xf]
      %v1455 = vld [vmem:[#allocation19 + $0x24] sm:$0xf]
      %v1456 = vld [vmem:[#allocation19 + $0x28] sm:$0xf]
      %v1457 = vld [vmem:[#allocation19 + $0x2c] sm:$0xf]
      %v1458 = vld [vmem:[#allocation19 + $0x30] sm:$0xf]
      %v1459 = vld [vmem:[#allocation19 + $0x34] sm:$0xf]
      %v1460 = vld [vmem:[#allocation19 + $0x38] sm:$0xf]
      %v1461 = vld [vmem:[#allocation19 + $0x3c] sm:$0xf]
      %v1462 = vld [vmem:[%s17] sm:$0x1]
      %v1464 = vperm.slane %v1462, 0
      %v1482 = vunpack.c.l.b16 %v1446
      %v1483 = vunpack.c.l.b16 %v1447
      %v1484 = vunpack.c.l.b16 %v1448
      %v1485 = vunpack.c.l.b16 %v1449
      %v1486 = vunpack.c.l.b16 %v1450
      %v1487 = vunpack.c.l.b16 %v1451
      %v1488 = vunpack.c.l.b16 %v1452
      %v1489 = vunpack.c.l.b16 %v1453
      %v1490 = vunpack.c.l.b16 %v1454
      %v1491 = vunpack.c.l.b16 %v1455
      %v1492 = vunpack.c.l.b16 %v1456
      %v1493 = vunpack.c.l.b16 %v1457
      %v1494 = vunpack.c.l.b16 %v1458
      %v1495 = vunpack.c.l.b16 %v1459
      %v1496 = vunpack.c.l.b16 %v1460
      %v1497 = vunpack.c.l.b16 %v1461
      %v1498 = vpack.c.b16 %v1483, %v1482
      %v1499 = vpack.c.b16 %v1485, %v1484
      %v1500 = vpack.c.b16 %v1487, %v1486
      %v1501 = vpack.c.b16 %v1489, %v1488
      %v1502 = vpack.c.b16 %v1491, %v1490
      %v1503 = vpack.c.b16 %v1493, %v1492
      %v1504 = vpack.c.b16 %v1495, %v1494
      %v1505 = vpack.c.b16 %v1497, %v1496
      %1514 = vmatpush.bf16.msra.mxu0 %v1505
      %1515 = vmatpush.bf16.msra.mxu0 %v1504
      %1516 = vmatpush.bf16.msra.mxu0 %v1503
      %1517 = vmatpush.bf16.msra.mxu0 %v1502
      %1518 = vmatpush.bf16.msra.mxu0 %v1501
      %1519 = vmatpush.bf16.msra.mxu0 %v1500
      %1520 = vmatpush.bf16.msra.mxu0 %v1499
      %1521 = vmatpush.bf16.msra.mxu0 %v1498
      %1522 = vmatmul.bf16.gmra.mxu0 %v1445
      %v1523 = vpop.f32.mrf.mxu0
      %v1524 = vadd.f32 %v1464, %v1523
      %v1525 = vpop.f32.mrf.mxu0
      %v1526 = vadd.f32 %v1464, %v1525
      %1527 = vdwg.mxu0
      %v1528 = vpack.c.bf16 %v1526, %v1524
      %v1529 = vld [vmem:[#allocation8] sm:$0xf]
      %v1530 = vld [vmem:[#allocation8 + $0x4] sm:$0xf]
      %v1533 = vunpack.c.l.b16 %v1529
      %v1534 = vunpack.c.l.b16 %v1530
      %v1535 = vpack.c.b16 %v1534, %v1533
      %v1537 = vsel %vm609, %v1535, 0
      %1539 = vmatpush.bf16.msra.mxu0 0
      %1540 = vmatpush.bf16.msra.mxu0 0
      %1541 = vmatpush.bf16.msra.mxu0 0
      %1542 = vmatpush.bf16.msra.mxu0 0
      %1543 = vmatpush.bf16.msra.mxu0 0
      %1544 = vmatpush.bf16.msra.mxu0 0
      %1545 = vmatpush.bf16.msra.mxu0 0
      %1546 = vmatpush.bf16.msra.mxu0 %v1528
      %1547 = vmatmul.bf16.gmra.mxu0 %v1537
      %v1548 = vpop.f32.mrf.mxu0
      %v1549 = vadd.f32 0.0, %v1548
      %v1550 = vpop.f32.mrf.mxu0
      %v1551 = vadd.f32 0.0, %v1550
      %1552 = vdwg.mxu0
      %v1553 = vld [vmem:[#allocation10] sm:$0xf]
      %v1554 = vld [vmem:[#allocation10 + $0x4] sm:$0xf]
      %v1557 = vunpack.c.l.b16 %v1553
      %v1558 = vunpack.c.l.b16 %v1554
      %v1559 = vpack.c.b16 %v1558, %v1557
      %v1561 = vsel %vm609, %v1559, 0
      %1563 = vmatpush.bf16.msra.mxu0 0
      %1564 = vmatpush.bf16.msra.mxu0 0
      %1565 = vmatpush.bf16.msra.mxu0 0
      %1566 = vmatpush.bf16.msra.mxu0 0
      %1567 = vmatpush.bf16.msra.mxu0 0
      %1568 = vmatpush.bf16.msra.mxu0 0
      %1569 = vmatpush.bf16.msra.mxu0 0
      %1570 = vmatpush.bf16.msra.mxu0 %v367
      %1571 = vmatmul.bf16.gmra.mxu0 %v1561
      %v1572 = vpop.f32.mrf.mxu0
      %v1573 = vadd.f32 0.0, %v1572
      %v1574 = vpop.f32.mrf.mxu0
      %v1575 = vadd.f32 0.0, %v1574
      %1576 = vdwg.mxu0
      %v1577 = vpack.c.bf16 %v1549, %v1549
      %v1578 = vpack.c.bf16 %v1551, %v1551
      %v1579 = vpack.c.bf16 %v1573, %v1573
      %v1580 = vpack.c.bf16 %v1575, %v1575
      %v1583 = vunpack.c.l.b16 %v1577
      %v1584 = vunpack.c.l.b16 %v1578
      %v1585 = vpack.c.b16 %v1584, %v1583
      %v1589 = vunpack.c.l.b16 %v1579
      %v1590 = vunpack.c.l.b16 %v1580
      %v1591 = vpack.c.b16 %v1590, %v1589
      %v1593 = vld [vmem:[#allocation22] sm:$0xff]
      %v1594 = vld [vmem:[#allocation22 + $0x8] sm:$0xff]
      %v1595 = vld [vmem:[#allocation22 + $0x10] sm:$0xff]
      %v1596 = vld [vmem:[#allocation22 + $0x18] sm:$0xff]
      %v1597 = vld [vmem:[#allocation22 + $0x20] sm:$0xff]
      %v1598 = vld [vmem:[#allocation22 + $0x28] sm:$0xff]
      %v1599 = vld [vmem:[#allocation22 + $0x30] sm:$0xff]
      %v1600 = vld [vmem:[#allocation22 + $0x38] sm:$0xff]
      %v1601 = vld [vmem:[#allocation22 + $0x40] sm:$0xff]
      %v1602 = vld [vmem:[#allocation22 + $0x48] sm:$0xff]
      %v1603 = vld [vmem:[#allocation22 + $0x50] sm:$0xff]
      %v1604 = vld [vmem:[#allocation22 + $0x58] sm:$0xff]
      %v1605 = vld [vmem:[#allocation22 + $0x60] sm:$0xff]
      %v1606 = vld [vmem:[#allocation22 + $0x68] sm:$0xff]
      %v1607 = vld [vmem:[#allocation22 + $0x70] sm:$0xff]
      %v1608 = vld [vmem:[#allocation22 + $0x78] sm:$0xff]
      %v1609 = vld [vmem:[#allocation22 + $0x80] sm:$0xff]
      %v1610 = vld [vmem:[#allocation22 + $0x88] sm:$0xff]
      %v1611 = vld [vmem:[#allocation22 + $0x90] sm:$0xff]
      %v1612 = vld [vmem:[#allocation22 + $0x98] sm:$0xff]
      %v1613 = vld [vmem:[#allocation22 + $0xa0] sm:$0xff]
      %v1614 = vld [vmem:[#allocation22 + $0xa8] sm:$0xff]
      %v1615 = vld [vmem:[#allocation22 + $0xb0] sm:$0xff]
      %v1616 = vld [vmem:[#allocation22 + $0xb8] sm:$0xff]
      %v1617 = vld [vmem:[#allocation22 + $0xc0] sm:$0xff]
      %v1618 = vld [vmem:[#allocation22 + $0xc8] sm:$0xff]
      %v1619 = vld [vmem:[#allocation22 + $0xd0] sm:$0xff]
      %v1620 = vld [vmem:[#allocation22 + $0xd8] sm:$0xff]
      %v1621 = vld [vmem:[#allocation22 + $0xe0] sm:$0xff]
      %v1622 = vld [vmem:[#allocation22 + $0xe8] sm:$0xff]
      %v1623 = vld [vmem:[#allocation22 + $0xf0] sm:$0xff]
      %v1624 = vld [vmem:[#allocation22 + $0xf8] sm:$0xff]
      %v1625 = vld [vmem:[#allocation22 + $0x100] sm:$0xff]
      %v1626 = vld [vmem:[#allocation22 + $0x108] sm:$0xff]
      %v1627 = vld [vmem:[#allocation22 + $0x110] sm:$0xff]
      %v1628 = vld [vmem:[#allocation22 + $0x118] sm:$0xff]
      %v1629 = vld [vmem:[#allocation22 + $0x120] sm:$0xff]
      %v1630 = vld [vmem:[#allocation22 + $0x128] sm:$0xff]
      %v1631 = vld [vmem:[#allocation22 + $0x130] sm:$0xff]
      %v1632 = vld [vmem:[#allocation22 + $0x138] sm:$0xff]
      %v1633 = vld [vmem:[#allocation22 + $0x140] sm:$0xff]
      %v1634 = vld [vmem:[#allocation22 + $0x148] sm:$0xff]
      %v1635 = vld [vmem:[#allocation22 + $0x150] sm:$0xff]
      %v1636 = vld [vmem:[#allocation22 + $0x158] sm:$0xff]
      %v1637 = vld [vmem:[#allocation22 + $0x160] sm:$0xff]
      %v1638 = vld [vmem:[#allocation22 + $0x168] sm:$0xff]
      %v1639 = vld [vmem:[#allocation22 + $0x170] sm:$0xff]
      %v1640 = vld [vmem:[#allocation22 + $0x178] sm:$0xff]
      %v1641 = vld [vmem:[#allocation22 + $0x180] sm:$0xff]
      %v1642 = vld [vmem:[#allocation22 + $0x188] sm:$0xff]
      %v1643 = vld [vmem:[#allocation22 + $0x190] sm:$0xff]
      %v1644 = vld [vmem:[#allocation22 + $0x198] sm:$0xff]
      %v1645 = vld [vmem:[#allocation22 + $0x1a0] sm:$0xff]
      %v1646 = vld [vmem:[#allocation22 + $0x1a8] sm:$0xff]
      %v1647 = vld [vmem:[#allocation22 + $0x1b0] sm:$0xff]
      %v1648 = vld [vmem:[#allocation22 + $0x1b8] sm:$0xff]
      %v1649 = vld [vmem:[#allocation22 + $0x1c0] sm:$0xff]
      %v1650 = vld [vmem:[#allocation22 + $0x1c8] sm:$0xff]
      %v1651 = vld [vmem:[#allocation22 + $0x1d0] sm:$0xff]
      %v1652 = vld [vmem:[#allocation22 + $0x1d8] sm:$0xff]
      %v1653 = vld [vmem:[#allocation22 + $0x1e0] sm:$0xff]
      %v1654 = vld [vmem:[#allocation22 + $0x1e8] sm:$0xff]
      %v1655 = vld [vmem:[#allocation22 + $0x1f0] sm:$0xff]
      %v1656 = vld [vmem:[#allocation22 + $0x1f8] sm:$0xff]
      %v1657 = vld [vmem:[#allocation22 + $0x200] sm:$0xff]
      %v1658 = vld [vmem:[#allocation22 + $0x208] sm:$0xff]
      %v1659 = vld [vmem:[#allocation22 + $0x210] sm:$0xff]
      %v1660 = vld [vmem:[#allocation22 + $0x218] sm:$0xff]
      %v1661 = vld [vmem:[#allocation22 + $0x220] sm:$0xff]
      %v1662 = vld [vmem:[#allocation22 + $0x228] sm:$0xff]
      %v1663 = vld [vmem:[#allocation22 + $0x230] sm:$0xff]
      %v1664 = vld [vmem:[#allocation22 + $0x238] sm:$0xff]
      %v1665 = vld [vmem:[#allocation22 + $0x240] sm:$0xff]
      %v1666 = vld [vmem:[#allocation22 + $0x248] sm:$0xff]
      %v1667 = vld [vmem:[#allocation22 + $0x250] sm:$0xff]
      %v1668 = vld [vmem:[#allocation22 + $0x258] sm:$0xff]
      %v1669 = vld [vmem:[#allocation22 + $0x260] sm:$0xff]
      %v1670 = vld [vmem:[#allocation22 + $0x268] sm:$0xff]
      %v1671 = vld [vmem:[#allocation22 + $0x270] sm:$0xff]
      %v1672 = vld [vmem:[#allocation22 + $0x278] sm:$0xff]
      %v1673 = vld [vmem:[#allocation22 + $0x280] sm:$0xff]
      %v1674 = vld [vmem:[#allocation22 + $0x288] sm:$0xff]
      %v1675 = vld [vmem:[#allocation22 + $0x290] sm:$0xff]
      %v1676 = vld [vmem:[#allocation22 + $0x298] sm:$0xff]
      %v1677 = vld [vmem:[#allocation22 + $0x2a0] sm:$0xff]
      %v1678 = vld [vmem:[#allocation22 + $0x2a8] sm:$0xff]
      %v1679 = vld [vmem:[#allocation22 + $0x2b0] sm:$0xff]
      %v1680 = vld [vmem:[#allocation22 + $0x2b8] sm:$0xff]
      %v1681 = vld [vmem:[#allocation22 + $0x2c0] sm:$0xff]
      %v1682 = vld [vmem:[#allocation22 + $0x2c8] sm:$0xff]
      %v1683 = vld [vmem:[#allocation22 + $0x2d0] sm:$0xff]
      %v1684 = vld [vmem:[#allocation22 + $0x2d8] sm:$0xff]
      %v1685 = vld [vmem:[#allocation22 + $0x2e0] sm:$0xff]
      %v1686 = vld [vmem:[#allocation22 + $0x2e8] sm:$0xff]
      %v1687 = vld [vmem:[#allocation22 + $0x2f0] sm:$0xff]
      %v1688 = vld [vmem:[#allocation22 + $0x2f8] sm:$0xff]
      %v1689 = vld [vmem:[%s21] sm:$0xf]
      %v1691 = vperm.slane %v1689, 0
      %v1692 = vperm.slane %v1689, 1
      %v1693 = vperm.slane %v1689, 2
      %v1694 = vperm.slane %v1689, 3
      %v1795 = vunpack.c.l.b16 %v1593
      %v1796 = vunpack.c.h.b16 %v1593
      %v1797 = vunpack.c.l.b16 %v1594
      %v1798 = vunpack.c.h.b16 %v1594
      %v1799 = vunpack.c.l.b16 %v1595
      %v1800 = vunpack.c.h.b16 %v1595
      %v1801 = vunpack.c.l.b16 %v1596
      %v1802 = vunpack.c.h.b16 %v1596
      %v1803 = vunpack.c.l.b16 %v1597
      %v1804 = vunpack.c.h.b16 %v1597
      %v1805 = vunpack.c.l.b16 %v1598
      %v1806 = vunpack.c.h.b16 %v1598
      %v1807 = vunpack.c.l.b16 %v1599
      %v1808 = vunpack.c.h.b16 %v1599
      %v1809 = vunpack.c.l.b16 %v1600
      %v1810 = vunpack.c.h.b16 %v1600
      %v1811 = vunpack.c.l.b16 %v1601
      %v1812 = vunpack.c.h.b16 %v1601
      %v1813 = vunpack.c.l.b16 %v1602
      %v1814 = vunpack.c.h.b16 %v1602
      %v1815 = vunpack.c.l.b16 %v1603
      %v1816 = vunpack.c.h.b16 %v1603
      %v1817 = vunpack.c.l.b16 %v1604
      %v1818 = vunpack.c.h.b16 %v1604
      %v1819 = vunpack.c.l.b16 %v1605
      %v1820 = vunpack.c.h.b16 %v1605
      %v1821 = vunpack.c.l.b16 %v1606
      %v1822 = vunpack.c.h.b16 %v1606
      %v1823 = vunpack.c.l.b16 %v1607
      %v1824 = vunpack.c.h.b16 %v1607
      %v1825 = vunpack.c.l.b16 %v1608
      %v1826 = vunpack.c.h.b16 %v1608
      %v1827 = vunpack.c.l.b16 %v1609
      %v1828 = vunpack.c.h.b16 %v1609
      %v1829 = vunpack.c.l.b16 %v1610
      %v1830 = vunpack.c.h.b16 %v1610
      %v1831 = vunpack.c.l.b16 %v1611
      %v1832 = vunpack.c.h.b16 %v1611
      %v1833 = vunpack.c.l.b16 %v1612
      %v1834 = vunpack.c.h.b16 %v1612
      %v1835 = vunpack.c.l.b16 %v1613
      %v1836 = vunpack.c.h.b16 %v1613
      %v1837 = vunpack.c.l.b16 %v1614
      %v1838 = vunpack.c.h.b16 %v1614
      %v1839 = vunpack.c.l.b16 %v1615
      %v1840 = vunpack.c.h.b16 %v1615
      %v1841 = vunpack.c.l.b16 %v1616
      %v1842 = vunpack.c.h.b16 %v1616
      %v1843 = vunpack.c.l.b16 %v1617
      %v1844 = vunpack.c.h.b16 %v1617
      %v1845 = vunpack.c.l.b16 %v1618
      %v1846 = vunpack.c.h.b16 %v1618
      %v1847 = vunpack.c.l.b16 %v1619
      %v1848 = vunpack.c.h.b16 %v1619
      %v1849 = vunpack.c.l.b16 %v1620
      %v1850 = vunpack.c.h.b16 %v1620
      %v1851 = vunpack.c.l.b16 %v1621
      %v1852 = vunpack.c.h.b16 %v1621
      %v1853 = vunpack.c.l.b16 %v1622
      %v1854 = vunpack.c.h.b16 %v1622
      %v1855 = vunpack.c.l.b16 %v1623
      %v1856 = vunpack.c.h.b16 %v1623
      %v1857 = vunpack.c.l.b16 %v1624
      %v1858 = vunpack.c.h.b16 %v1624
      %v1859 = vunpack.c.l.b16 %v1625
      %v1860 = vunpack.c.h.b16 %v1625
      %v1861 = vunpack.c.l.b16 %v1626
      %v1862 = vunpack.c.h.b16 %v1626
      %v1863 = vunpack.c.l.b16 %v1627
      %v1864 = vunpack.c.h.b16 %v1627
      %v1865 = vunpack.c.l.b16 %v1628
      %v1866 = vunpack.c.h.b16 %v1628
      %v1867 = vunpack.c.l.b16 %v1629
      %v1868 = vunpack.c.h.b16 %v1629
      %v1869 = vunpack.c.l.b16 %v1630
      %v1870 = vunpack.c.h.b16 %v1630
      %v1871 = vunpack.c.l.b16 %v1631
      %v1872 = vunpack.c.h.b16 %v1631
      %v1873 = vunpack.c.l.b16 %v1632
      %v1874 = vunpack.c.h.b16 %v1632
      %v1875 = vunpack.c.l.b16 %v1633
      %v1876 = vunpack.c.h.b16 %v1633
      %v1877 = vunpack.c.l.b16 %v1634
      %v1878 = vunpack.c.h.b16 %v1634
      %v1879 = vunpack.c.l.b16 %v1635
      %v1880 = vunpack.c.h.b16 %v1635
      %v1881 = vunpack.c.l.b16 %v1636
      %v1882 = vunpack.c.h.b16 %v1636
      %v1883 = vunpack.c.l.b16 %v1637
      %v1884 = vunpack.c.h.b16 %v1637
      %v1885 = vunpack.c.l.b16 %v1638
      %v1886 = vunpack.c.h.b16 %v1638
      %v1887 = vunpack.c.l.b16 %v1639
      %v1888 = vunpack.c.h.b16 %v1639
      %v1889 = vunpack.c.l.b16 %v1640
      %v1890 = vunpack.c.h.b16 %v1640
      %v1891 = vunpack.c.l.b16 %v1641
      %v1892 = vunpack.c.h.b16 %v1641
      %v1893 = vunpack.c.l.b16 %v1642
      %v1894 = vunpack.c.h.b16 %v1642
      %v1895 = vunpack.c.l.b16 %v1643
      %v1896 = vunpack.c.h.b16 %v1643
      %v1897 = vunpack.c.l.b16 %v1644
      %v1898 = vunpack.c.h.b16 %v1644
      %v1899 = vunpack.c.l.b16 %v1645
      %v1900 = vunpack.c.h.b16 %v1645
      %v1901 = vunpack.c.l.b16 %v1646
      %v1902 = vunpack.c.h.b16 %v1646
      %v1903 = vunpack.c.l.b16 %v1647
      %v1904 = vunpack.c.h.b16 %v1647
      %v1905 = vunpack.c.l.b16 %v1648
      %v1906 = vunpack.c.h.b16 %v1648
      %v1907 = vunpack.c.l.b16 %v1649
      %v1908 = vunpack.c.h.b16 %v1649
      %v1909 = vunpack.c.l.b16 %v1650
      %v1910 = vunpack.c.h.b16 %v1650
      %v1911 = vunpack.c.l.b16 %v1651
      %v1912 = vunpack.c.h.b16 %v1651
      %v1913 = vunpack.c.l.b16 %v1652
      %v1914 = vunpack.c.h.b16 %v1652
      %v1915 = vunpack.c.l.b16 %v1653
      %v1916 = vunpack.c.h.b16 %v1653
      %v1917 = vunpack.c.l.b16 %v1654
      %v1918 = vunpack.c.h.b16 %v1654
      %v1919 = vunpack.c.l.b16 %v1655
      %v1920 = vunpack.c.h.b16 %v1655
      %v1921 = vunpack.c.l.b16 %v1656
      %v1922 = vunpack.c.h.b16 %v1656
      %v1923 = vunpack.c.l.b16 %v1657
      %v1924 = vunpack.c.h.b16 %v1657
      %v1925 = vunpack.c.l.b16 %v1658
      %v1926 = vunpack.c.h.b16 %v1658
      %v1927 = vunpack.c.l.b16 %v1659
      %v1928 = vunpack.c.h.b16 %v1659
      %v1929 = vunpack.c.l.b16 %v1660
      %v1930 = vunpack.c.h.b16 %v1660
      %v1931 = vunpack.c.l.b16 %v1661
      %v1932 = vunpack.c.h.b16 %v1661
      %v1933 = vunpack.c.l.b16 %v1662
      %v1934 = vunpack.c.h.b16 %v1662
      %v1935 = vunpack.c.l.b16 %v1663
      %v1936 = vunpack.c.h.b16 %v1663
      %v1937 = vunpack.c.l.b16 %v1664
      %v1938 = vunpack.c.h.b16 %v1664
      %v1939 = vunpack.c.l.b16 %v1665
      %v1940 = vunpack.c.h.b16 %v1665
      %v1941 = vunpack.c.l.b16 %v1666
      %v1942 = vunpack.c.h.b16 %v1666
      %v1943 = vunpack.c.l.b16 %v1667
      %v1944 = vunpack.c.h.b16 %v1667
      %v1945 = vunpack.c.l.b16 %v1668
      %v1946 = vunpack.c.h.b16 %v1668
      %v1947 = vunpack.c.l.b16 %v1669
      %v1948 = vunpack.c.h.b16 %v1669
      %v1949 = vunpack.c.l.b16 %v1670
      %v1950 = vunpack.c.h.b16 %v1670
      %v1951 = vunpack.c.l.b16 %v1671
      %v1952 = vunpack.c.h.b16 %v1671
      %v1953 = vunpack.c.l.b16 %v1672
      %v1954 = vunpack.c.h.b16 %v1672
      %v1955 = vunpack.c.l.b16 %v1673
      %v1956 = vunpack.c.h.b16 %v1673
      %v1957 = vunpack.c.l.b16 %v1674
      %v1958 = vunpack.c.h.b16 %v1674
      %v1959 = vunpack.c.l.b16 %v1675
      %v1960 = vunpack.c.h.b16 %v1675
      %v1961 = vunpack.c.l.b16 %v1676
      %v1962 = vunpack.c.h.b16 %v1676
      %v1963 = vunpack.c.l.b16 %v1677
      %v1964 = vunpack.c.h.b16 %v1677
      %v1965 = vunpack.c.l.b16 %v1678
      %v1966 = vunpack.c.h.b16 %v1678
      %v1967 = vunpack.c.l.b16 %v1679
      %v1968 = vunpack.c.h.b16 %v1679
      %v1969 = vunpack.c.l.b16 %v1680
      %v1970 = vunpack.c.h.b16 %v1680
      %v1971 = vunpack.c.l.b16 %v1681
      %v1972 = vunpack.c.h.b16 %v1681
      %v1973 = vunpack.c.l.b16 %v1682
      %v1974 = vunpack.c.h.b16 %v1682
      %v1975 = vunpack.c.l.b16 %v1683
      %v1976 = vunpack.c.h.b16 %v1683
      %v1977 = vunpack.c.l.b16 %v1684
      %v1978 = vunpack.c.h.b16 %v1684
      %v1979 = vunpack.c.l.b16 %v1685
      %v1980 = vunpack.c.h.b16 %v1685
      %v1981 = vunpack.c.l.b16 %v1686
      %v1982 = vunpack.c.h.b16 %v1686
      %v1983 = vunpack.c.l.b16 %v1687
      %v1984 = vunpack.c.h.b16 %v1687
      %v1985 = vunpack.c.l.b16 %v1688
      %v1986 = vunpack.c.h.b16 %v1688
      %v1987 = vpack.c.b16 %v1799, %v1795
      %v1988 = vpack.c.b16 %v1800, %v1796
      %v1989 = vpack.c.b16 %v1801, %v1797
      %v1990 = vpack.c.b16 %v1802, %v1798
      %v1991 = vpack.c.b16 %v1807, %v1803
      %v1992 = vpack.c.b16 %v1808, %v1804
      %v1993 = vpack.c.b16 %v1809, %v1805
      %v1994 = vpack.c.b16 %v1810, %v1806
      %v1995 = vpack.c.b16 %v1815, %v1811
      %v1996 = vpack.c.b16 %v1816, %v1812
      %v1997 = vpack.c.b16 %v1817, %v1813
      %v1998 = vpack.c.b16 %v1818, %v1814
      %v1999 = vpack.c.b16 %v1823, %v1819
      %v2000 = vpack.c.b16 %v1824, %v1820
      %v2001 = vpack.c.b16 %v1825, %v1821
      %v2002 = vpack.c.b16 %v1826, %v1822
      %v2003 = vpack.c.b16 %v1831, %v1827
      %v2004 = vpack.c.b16 %v1832, %v1828
      %v2005 = vpack.c.b16 %v1833, %v1829
      %v2006 = vpack.c.b16 %v1834, %v1830
      %v2007 = vpack.c.b16 %v1839, %v1835
      %v2008 = vpack.c.b16 %v1840, %v1836
      %v2009 = vpack.c.b16 %v1841, %v1837
      %v2010 = vpack.c.b16 %v1842, %v1838
      %v2011 = vpack.c.b16 %v1847, %v1843
      %v2012 = vpack.c.b16 %v1848, %v1844
      %v2013 = vpack.c.b16 %v1849, %v1845
      %v2014 = vpack.c.b16 %v1850, %v1846
      %v2015 = vpack.c.b16 %v1855, %v1851
      %v2016 = vpack.c.b16 %v1856, %v1852
      %v2017 = vpack.c.b16 %v1857, %v1853
      %v2018 = vpack.c.b16 %v1858, %v1854
      %v2019 = vpack.c.b16 %v1863, %v1859
      %v2020 = vpack.c.b16 %v1864, %v1860
      %v2021 = vpack.c.b16 %v1865, %v1861
      %v2022 = vpack.c.b16 %v1866, %v1862
      %v2023 = vpack.c.b16 %v1871, %v1867
      %v2024 = vpack.c.b16 %v1872, %v1868
      %v2025 = vpack.c.b16 %v1873, %v1869
      %v2026 = vpack.c.b16 %v1874, %v1870
      %v2027 = vpack.c.b16 %v1879, %v1875
      %v2028 = vpack.c.b16 %v1880, %v1876
      %v2029 = vpack.c.b16 %v1881, %v1877
      %v2030 = vpack.c.b16 %v1882, %v1878
      %v2031 = vpack.c.b16 %v1887, %v1883
      %v2032 = vpack.c.b16 %v1888, %v1884
      %v2033 = vpack.c.b16 %v1889, %v1885
      %v2034 = vpack.c.b16 %v1890, %v1886
      %v2035 = vpack.c.b16 %v1895, %v1891
      %v2036 = vpack.c.b16 %v1896, %v1892
      %v2037 = vpack.c.b16 %v1897, %v1893
      %v2038 = vpack.c.b16 %v1898, %v1894
      %v2039 = vpack.c.b16 %v1903, %v1899
      %v2040 = vpack.c.b16 %v1904, %v1900
      %v2041 = vpack.c.b16 %v1905, %v1901
      %v2042 = vpack.c.b16 %v1906, %v1902
      %v2043 = vpack.c.b16 %v1911, %v1907
      %v2044 = vpack.c.b16 %v1912, %v1908
      %v2045 = vpack.c.b16 %v1913, %v1909
      %v2046 = vpack.c.b16 %v1914, %v1910
      %v2047 = vpack.c.b16 %v1919, %v1915
      %v2048 = vpack.c.b16 %v1920, %v1916
      %v2049 = vpack.c.b16 %v1921, %v1917
      %v2050 = vpack.c.b16 %v1922, %v1918
      %v2051 = vpack.c.b16 %v1927, %v1923
      %v2052 = vpack.c.b16 %v1928, %v1924
      %v2053 = vpack.c.b16 %v1929, %v1925
      %v2054 = vpack.c.b16 %v1930, %v1926
      %v2055 = vpack.c.b16 %v1935, %v1931
      %v2056 = vpack.c.b16 %v1936, %v1932
      %v2057 = vpack.c.b16 %v1937, %v1933
      %v2058 = vpack.c.b16 %v1938, %v1934
      %v2059 = vpack.c.b16 %v1943, %v1939
      %v2060 = vpack.c.b16 %v1944, %v1940
      %v2061 = vpack.c.b16 %v1945, %v1941
      %v2062 = vpack.c.b16 %v1946, %v1942
      %v2063 = vpack.c.b16 %v1951, %v1947
      %v2064 = vpack.c.b16 %v1952, %v1948
      %v2065 = vpack.c.b16 %v1953, %v1949
      %v2066 = vpack.c.b16 %v1954, %v1950
      %v2067 = vpack.c.b16 %v1959, %v1955
      %v2068 = vpack.c.b16 %v1960, %v1956
      %v2069 = vpack.c.b16 %v1961, %v1957
      %v2070 = vpack.c.b16 %v1962, %v1958
      %v2071 = vpack.c.b16 %v1967, %v1963
      %v2072 = vpack.c.b16 %v1968, %v1964
      %v2073 = vpack.c.b16 %v1969, %v1965
      %v2074 = vpack.c.b16 %v1970, %v1966
      %v2075 = vpack.c.b16 %v1975, %v1971
      %v2076 = vpack.c.b16 %v1976, %v1972
      %v2077 = vpack.c.b16 %v1977, %v1973
      %v2078 = vpack.c.b16 %v1978, %v1974
      %v2079 = vpack.c.b16 %v1983, %v1979
      %v2080 = vpack.c.b16 %v1984, %v1980
      %v2081 = vpack.c.b16 %v1985, %v1981
      %v2082 = vpack.c.b16 %v1986, %v1982
      %2179 = vmatpush.bf16.msra.mxu0 %v2015
      %2180 = vmatpush.bf16.msra.mxu0 %v2011
      %2181 = vmatpush.bf16.msra.mxu0 %v2007
      %2182 = vmatpush.bf16.msra.mxu0 %v2003
      %2183 = vmatpush.bf16.msra.mxu0 %v1999
      %2184 = vmatpush.bf16.msra.mxu0 %v1995
      %2185 = vmatpush.bf16.msra.mxu0 %v1991
      %2186 = vmatpush.bf16.msra.mxu0 %v1987
      %2187 = vmatmul.bf16.gmra.mxu0 %v367
      %v2188 = vpop.f32.mrf.mxu0
      %v2189 = vadd.f32 %v1691, %v2188
      %v2190 = vpop.f32.mrf.mxu0
      %v2191 = vadd.f32 %v1691, %v2190
      %2192 = vdwg.mxu0
      %2193 = vmatpush.bf16.msra.mxu0 %v2047
      %2194 = vmatpush.bf16.msra.mxu0 %v2043
      %2195 = vmatpush.bf16.msra.mxu0 %v2039
      %2196 = vmatpush.bf16.msra.mxu0 %v2035
      %2197 = vmatpush.bf16.msra.mxu0 %v2031
      %2198 = vmatpush.bf16.msra.mxu0 %v2027
      %2199 = vmatpush.bf16.msra.mxu0 %v2023
      %2200 = vmatpush.bf16.msra.mxu0 %v2019
      %2201 = vmatmul.bf16.gmra.mxu0 %v1585
      %v2202 = vpop.f32.mrf.mxu0
      %v2203 = vadd.f32 %v2189, %v2202
      %v2204 = vpop.f32.mrf.mxu0
      %v2205 = vadd.f32 %v2191, %v2204
      %2206 = vdwg.mxu0
      %2207 = vmatpush.bf16.msra.mxu0 %v2079
      %2208 = vmatpush.bf16.msra.mxu0 %v2075
      %2209 = vmatpush.bf16.msra.mxu0 %v2071
      %2210 = vmatpush.bf16.msra.mxu0 %v2067
      %2211 = vmatpush.bf16.msra.mxu0 %v2063
      %2212 = vmatpush.bf16.msra.mxu0 %v2059
      %2213 = vmatpush.bf16.msra.mxu0 %v2055
      %2214 = vmatpush.bf16.msra.mxu0 %v2051
      %2215 = vmatmul.bf16.gmra.mxu0 %v1591
      %v2216 = vpop.f32.mrf.mxu0
      %v2217 = vadd.f32 %v2203, %v2216
      %v2218 = vpop.f32.mrf.mxu0
      %v2219 = vadd.f32 %v2205, %v2218
      %2220 = vdwg.mxu0
      %2221 = vmatpush.bf16.msra.mxu0 %v2016
      %2222 = vmatpush.bf16.msra.mxu0 %v2012
      %2223 = vmatpush.bf16.msra.mxu0 %v2008
      %2224 = vmatpush.bf16.msra.mxu0 %v2004
      %2225 = vmatpush.bf16.msra.mxu0 %v2000
      %2226 = vmatpush.bf16.msra.mxu0 %v1996
      %2227 = vmatpush.bf16.msra.mxu0 %v1992
      %2228 = vmatpush.bf16.msra.mxu0 %v1988
      %2229 = vmatmul.bf16.gmra.mxu0 %v367
      %v2230 = vpop.f32.mrf.mxu0
      %v2231 = vadd.f32 %v1692, %v2230
      %v2232 = vpop.f32.mrf.mxu0
      %v2233 = vadd.f32 %v1692, %v2232
      %2234 = vdwg.mxu0
      %2235 = vmatpush.bf16.msra.mxu0 %v2048
      %2236 = vmatpush.bf16.msra.mxu0 %v2044
      %2237 = vmatpush.bf16.msra.mxu0 %v2040
      %2238 = vmatpush.bf16.msra.mxu0 %v2036
      %2239 = vmatpush.bf16.msra.mxu0 %v2032
      %2240 = vmatpush.bf16.msra.mxu0 %v2028
      %2241 = vmatpush.bf16.msra.mxu0 %v2024
      %2242 = vmatpush.bf16.msra.mxu0 %v2020
      %2243 = vmatmul.bf16.gmra.mxu0 %v1585
      %v2244 = vpop.f32.mrf.mxu0
      %v2245 = vadd.f32 %v2231, %v2244
      %v2246 = vpop.f32.mrf.mxu0
      %v2247 = vadd.f32 %v2233, %v2246
      %2248 = vdwg.mxu0
      %2249 = vmatpush.bf16.msra.mxu0 %v2080
      %2250 = vmatpush.bf16.msra.mxu0 %v2076
      %2251 = vmatpush.bf16.msra.mxu0 %v2072
      %2252 = vmatpush.bf16.msra.mxu0 %v2068
      %2253 = vmatpush.bf16.msra.mxu0 %v2064
      %2254 = vmatpush.bf16.msra.mxu0 %v2060
      %2255 = vmatpush.bf16.msra.mxu0 %v2056
      %2256 = vmatpush.bf16.msra.mxu0 %v2052
      %2257 = vmatmul.bf16.gmra.mxu0 %v1591
      %v2258 = vpop.f32.mrf.mxu0
      %v2259 = vadd.f32 %v2245, %v2258
      %v2260 = vpop.f32.mrf.mxu0
      %v2261 = vadd.f32 %v2247, %v2260
      %2262 = vdwg.mxu0
      %2263 = vmatpush.bf16.msra.mxu0 %v2017
      %2264 = vmatpush.bf16.msra.mxu0 %v2013
      %2265 = vmatpush.bf16.msra.mxu0 %v2009
      %2266 = vmatpush.bf16.msra.mxu0 %v2005
      %2267 = vmatpush.bf16.msra.mxu0 %v2001
      %2268 = vmatpush.bf16.msra.mxu0 %v1997
      %2269 = vmatpush.bf16.msra.mxu0 %v1993
      %2270 = vmatpush.bf16.msra.mxu0 %v1989
      %2271 = vmatmul.bf16.gmra.mxu0 %v367
      %v2272 = vpop.f32.mrf.mxu0
      %v2273 = vadd.f32 %v1693, %v2272
      %v2274 = vpop.f32.mrf.mxu0
      %v2275 = vadd.f32 %v1693, %v2274
      %2276 = vdwg.mxu0
      %2277 = vmatpush.bf16.msra.mxu0 %v2049
      %2278 = vmatpush.bf16.msra.mxu0 %v2045
      %2279 = vmatpush.bf16.msra.mxu0 %v2041
      %2280 = vmatpush.bf16.msra.mxu0 %v2037
      %2281 = vmatpush.bf16.msra.mxu0 %v2033
      %2282 = vmatpush.bf16.msra.mxu0 %v2029
      %2283 = vmatpush.bf16.msra.mxu0 %v2025
      %2284 = vmatpush.bf16.msra.mxu0 %v2021
      %2285 = vmatmul.bf16.gmra.mxu0 %v1585
      %v2286 = vpop.f32.mrf.mxu0
      %v2287 = vadd.f32 %v2273, %v2286
      %v2288 = vpop.f32.mrf.mxu0
      %v2289 = vadd.f32 %v2275, %v2288
      %2290 = vdwg.mxu0
      %2291 = vmatpush.bf16.msra.mxu0 %v2081
      %2292 = vmatpush.bf16.msra.mxu0 %v2077
      %2293 = vmatpush.bf16.msra.mxu0 %v2073
      %2294 = vmatpush.bf16.msra.mxu0 %v2069
      %2295 = vmatpush.bf16.msra.mxu0 %v2065
      %2296 = vmatpush.bf16.msra.mxu0 %v2061
      %2297 = vmatpush.bf16.msra.mxu0 %v2057
      %2298 = vmatpush.bf16.msra.mxu0 %v2053
      %2299 = vmatmul.bf16.gmra.mxu0 %v1591
      %v2300 = vpop.f32.mrf.mxu0
      %v2301 = vadd.f32 %v2287, %v2300
      %v2302 = vpop.f32.mrf.mxu0
      %v2303 = vadd.f32 %v2289, %v2302
      %2304 = vdwg.mxu0
      %2305 = vmatpush.bf16.msra.mxu0 %v2018
      %2306 = vmatpush.bf16.msra.mxu0 %v2014
      %2307 = vmatpush.bf16.msra.mxu0 %v2010
      %2308 = vmatpush.bf16.msra.mxu0 %v2006
      %2309 = vmatpush.bf16.msra.mxu0 %v2002
      %2310 = vmatpush.bf16.msra.mxu0 %v1998
      %2311 = vmatpush.bf16.msra.mxu0 %v1994
      %2312 = vmatpush.bf16.msra.mxu0 %v1990
      %2313 = vmatmul.bf16.gmra.mxu0 %v367
      %v2314 = vpop.f32.mrf.mxu0
      %v2315 = vadd.f32 %v1694, %v2314
      %v2316 = vpop.f32.mrf.mxu0
      %v2317 = vadd.f32 %v1694, %v2316
      %2318 = vdwg.mxu0
      %2319 = vmatpush.bf16.msra.mxu0 %v2050
      %2320 = vmatpush.bf16.msra.mxu0 %v2046
      %2321 = vmatpush.bf16.msra.mxu0 %v2042
      %2322 = vmatpush.bf16.msra.mxu0 %v2038
      %2323 = vmatpush.bf16.msra.mxu0 %v2034
      %2324 = vmatpush.bf16.msra.mxu0 %v2030
      %2325 = vmatpush.bf16.msra.mxu0 %v2026
      %2326 = vmatpush.bf16.msra.mxu0 %v2022
      %2327 = vmatmul.bf16.gmra.mxu0 %v1585
      %v2328 = vpop.f32.mrf.mxu0
      %v2329 = vadd.f32 %v2315, %v2328
      %v2330 = vpop.f32.mrf.mxu0
      %v2331 = vadd.f32 %v2317, %v2330
      %2332 = vdwg.mxu0
      %2333 = vmatpush.bf16.msra.mxu0 %v2082
      %2334 = vmatpush.bf16.msra.mxu0 %v2078
      %2335 = vmatpush.bf16.msra.mxu0 %v2074
      %2336 = vmatpush.bf16.msra.mxu0 %v2070
      %2337 = vmatpush.bf16.msra.mxu0 %v2066
      %2338 = vmatpush.bf16.msra.mxu0 %v2062
      %2339 = vmatpush.bf16.msra.mxu0 %v2058
      %2340 = vmatpush.bf16.msra.mxu0 %v2054
      %2341 = vmatmul.bf16.gmra.mxu0 %v1591
      %v2342 = vpop.f32.mrf.mxu0
      %v2343 = vadd.f32 %v2329, %v2342
      %v2344 = vpop.f32.mrf.mxu0
      %v2345 = vadd.f32 %v2331, %v2344
      %2346 = vdwg.mxu0
      %v2347 = vxor.u32 %v2217, 2147483648
      %v2348 = vxor.u32 %v2219, 2147483648
      %v2349 = vmul.f32 %v2347, 1.442695
      %v2350 = vpow.pop %v2349
      %v2351 = vmul.f32 %v2348, 1.442695
      %v2352 = vpow.pop %v2351
      %v2353 = vadd.f32 %v2350, 1.0
      %v2354 = vadd.f32 %v2352, 1.0
      %v2355 = vrcp.pop %v2353
      %v2356 = vmul.f32 %v2353, %v2355
      %v2357 = vsub.f32 1.0, %v2356
      %v2358 = vmul.f32 %v2355, %v2357
      %v2359 = vadd.f32 %v2355, %v2358
      %vm2360 = vweird.f32 %v2353
      %vm2361 = vweird.f32 %v2355
      %vm2362 = vmor %vm2360, %vm2361
      %v2363 = vsel %vm2362, %v2355, %v2359
      %v2364 = vand.u32 2147483647, %v2353
      %vm2365 = vcmp.eq.f32.partialorder %v2364, 8.507059e+37
      %v2366 = vand.u32 %v2353, 2147483648
      %v2367 = vor.u32 1.1754944e-38, %v2366
      %v2368 = vsel %vm2365, %v2367, %v2363
      %v2369 = vmul.f32 1.0, %v2368
      %v2370 = vrcp.pop %v2354
      %v2371 = vmul.f32 %v2354, %v2370
      %v2372 = vsub.f32 1.0, %v2371
      %v2373 = vmul.f32 %v2370, %v2372
      %v2374 = vadd.f32 %v2370, %v2373
      %vm2375 = vweird.f32 %v2354
      %vm2376 = vweird.f32 %v2370
      %vm2377 = vmor %vm2375, %vm2376
      %v2378 = vsel %vm2377, %v2370, %v2374
      %v2379 = vand.u32 2147483647, %v2354
      %vm2380 = vcmp.eq.f32.partialorder %v2379, 8.507059e+37
      %v2381 = vand.u32 %v2354, 2147483648
      %v2382 = vor.u32 1.1754944e-38, %v2381
      %v2383 = vsel %vm2380, %v2382, %v2378
      %v2384 = vmul.f32 1.0, %v2383
      %v2385 = vxor.u32 %v2259, 2147483648
      %v2386 = vxor.u32 %v2261, 2147483648
      %v2387 = vmul.f32 %v2385, 1.442695
      %v2388 = vpow.pop %v2387
      %v2389 = vmul.f32 %v2386, 1.442695
      %v2390 = vpow.pop %v2389
      %v2391 = vadd.f32 %v2388, 1.0
      %v2392 = vadd.f32 %v2390, 1.0
      %v2393 = vrcp.pop %v2391
      %v2394 = vmul.f32 %v2391, %v2393
      %v2395 = vsub.f32 1.0, %v2394
      %v2396 = vmul.f32 %v2393, %v2395
      %v2397 = vadd.f32 %v2393, %v2396
      %vm2398 = vweird.f32 %v2391
      %vm2399 = vweird.f32 %v2393
      %vm2400 = vmor %vm2398, %vm2399
      %v2401 = vsel %vm2400, %v2393, %v2397
      %v2402 = vand.u32 2147483647, %v2391
      %vm2403 = vcmp.eq.f32.partialorder %v2402, 8.507059e+37
      %v2404 = vand.u32 %v2391, 2147483648
      %v2405 = vor.u32 1.1754944e-38, %v2404
      %v2406 = vsel %vm2403, %v2405, %v2401
      %v2407 = vmul.f32 1.0, %v2406
      %v2408 = vrcp.pop %v2392
      %v2409 = vmul.f32 %v2392, %v2408
      %v2410 = vsub.f32 1.0, %v2409
      %v2411 = vmul.f32 %v2408, %v2410
      %v2412 = vadd.f32 %v2408, %v2411
      %vm2413 = vweird.f32 %v2392
      %vm2414 = vweird.f32 %v2408
      %vm2415 = vmor %vm2413, %vm2414
      %v2416 = vsel %vm2415, %v2408, %v2412
      %v2417 = vand.u32 2147483647, %v2392
      %vm2418 = vcmp.eq.f32.partialorder %v2417, 8.507059e+37
      %v2419 = vand.u32 %v2392, 2147483648
      %v2420 = vor.u32 1.1754944e-38, %v2419
      %v2421 = vsel %vm2418, %v2420, %v2416
      %v2422 = vmul.f32 1.0, %v2421
      %v2423 = vtanh.pop %v2301
      %v2424 = vtanh.pop %v2303
      %v2425 = vxor.u32 %v2343, 2147483648
      %v2426 = vxor.u32 %v2345, 2147483648
      %v2427 = vmul.f32 %v2425, 1.442695
      %v2428 = vpow.pop %v2427
      %v2429 = vmul.f32 %v2426, 1.442695
      %v2430 = vpow.pop %v2429
      %v2431 = vadd.f32 %v2428, 1.0
      %v2432 = vadd.f32 %v2430, 1.0
      %v2433 = vrcp.pop %v2431
      %v2434 = vmul.f32 %v2431, %v2433
      %v2435 = vsub.f32 1.0, %v2434
      %v2436 = vmul.f32 %v2433, %v2435
      %v2437 = vadd.f32 %v2433, %v2436
      %vm2438 = vweird.f32 %v2431
      %vm2439 = vweird.f32 %v2433
      %vm2440 = vmor %vm2438, %vm2439
      %v2441 = vsel %vm2440, %v2433, %v2437
      %v2442 = vand.u32 2147483647, %v2431
      %vm2443 = vcmp.eq.f32.partialorder %v2442, 8.507059e+37
      %v2444 = vand.u32 %v2431, 2147483648
      %v2445 = vor.u32 1.1754944e-38, %v2444
      %v2446 = vsel %vm2443, %v2445, %v2441
      %v2447 = vmul.f32 1.0, %v2446
      %v2448 = vrcp.pop %v2432
      %v2449 = vmul.f32 %v2432, %v2448
      %v2450 = vsub.f32 1.0, %v2449
      %v2451 = vmul.f32 %v2448, %v2450
      %v2452 = vadd.f32 %v2448, %v2451
      %vm2453 = vweird.f32 %v2432
      %vm2454 = vweird.f32 %v2448
      %vm2455 = vmor %vm2453, %vm2454
      %v2456 = vsel %vm2455, %v2448, %v2452
      %v2457 = vand.u32 2147483647, %v2432
      %vm2458 = vcmp.eq.f32.partialorder %v2457, 8.507059e+37
      %v2459 = vand.u32 %v2432, 2147483648
      %v2460 = vor.u32 1.1754944e-38, %v2459
      %v2461 = vsel %vm2458, %v2460, %v2456
      %v2462 = vmul.f32 1.0, %v2461
      %v2463 = vmul.f32 %v2407, %v335
      %v2464 = vmul.f32 %v2422, %v336
      %v2465 = vmul.f32 %v2369, %v2423
      %v2466 = vmul.f32 %v2384, %v2424
      %v2467 = vadd.f32 %v2463, %v2465
      %v2468 = vadd.f32 %v2464, %v2466
      %v2469 = vtanh.pop %v2467
      %v2470 = vtanh.pop %v2468
      %v2471 = vmul.f32 %v2447, %v2469
      %v2472 = vmul.f32 %v2462, %v2470
    $region178: #{tpu_custom_call.1} parent=1 // loop_footer
      %s332 = sadd.s32 1, %s328
    $region179: #{tpu_custom_call.1} parent=1 // loop_footer_branch
      %327 = sbr.rel target = $region175
    $region180: #{tpu_custom_call.1} parent=1 // loop_exit
      _
    %v2473 = vpack.c.bf16 %v334, %v333
    %v2474 = vld [vmem:[#allocation23] sm:$0xf]
    %v2475 = vld [vmem:[#allocation23 + $0x4] sm:$0xf]
    %v2476 = vld [vmem:[#allocation23 + $0x8] sm:$0xf]
    %v2477 = vld [vmem:[#allocation23 + $0xc] sm:$0xf]
    %v2478 = vld [vmem:[#allocation23 + $0x10] sm:$0xf]
    %v2479 = vld [vmem:[#allocation23 + $0x14] sm:$0xf]
    %v2480 = vld [vmem:[#allocation23 + $0x18] sm:$0xf]
    %v2481 = vld [vmem:[#allocation23 + $0x1c] sm:$0xf]
    %v2482 = vld [vmem:[#allocation23 + $0x20] sm:$0xf]
    %v2483 = vld [vmem:[#allocation23 + $0x24] sm:$0xf]
    %v2484 = vld [vmem:[#allocation23 + $0x28] sm:$0xf]
    %v2485 = vld [vmem:[#allocation23 + $0x2c] sm:$0xf]
    %v2486 = vld [vmem:[#allocation23 + $0x30] sm:$0xf]
    %v2487 = vld [vmem:[#allocation23 + $0x34] sm:$0xf]
    %v2488 = vld [vmem:[#allocation23 + $0x38] sm:$0xf]
    %v2489 = vld [vmem:[#allocation23 + $0x3c] sm:$0xf]
    %v2490 = vld [vmem:[%s23] sm:$0x1]
    %v2492 = vperm.slane %v2490, 0
    %v2510 = vunpack.c.l.b16 %v2474
    %v2511 = vunpack.c.l.b16 %v2475
    %v2512 = vunpack.c.l.b16 %v2476
    %v2513 = vunpack.c.l.b16 %v2477
    %v2514 = vunpack.c.l.b16 %v2478
    %v2515 = vunpack.c.l.b16 %v2479
    %v2516 = vunpack.c.l.b16 %v2480
    %v2517 = vunpack.c.l.b16 %v2481
    %v2518 = vunpack.c.l.b16 %v2482
    %v2519 = vunpack.c.l.b16 %v2483
    %v2520 = vunpack.c.l.b16 %v2484
    %v2521 = vunpack.c.l.b16 %v2485
    %v2522 = vunpack.c.l.b16 %v2486
    %v2523 = vunpack.c.l.b16 %v2487
    %v2524 = vunpack.c.l.b16 %v2488
    %v2525 = vunpack.c.l.b16 %v2489
    %v2526 = vpack.c.b16 %v2511, %v2510
    %v2527 = vpack.c.b16 %v2513, %v2512
    %v2528 = vpack.c.b16 %v2515, %v2514
    %v2529 = vpack.c.b16 %v2517, %v2516
    %v2530 = vpack.c.b16 %v2519, %v2518
    %v2531 = vpack.c.b16 %v2521, %v2520
    %v2532 = vpack.c.b16 %v2523, %v2522
    %v2533 = vpack.c.b16 %v2525, %v2524
    %2542 = vmatpush.bf16.msra.mxu0 %v2533
    %2543 = vmatpush.bf16.msra.mxu0 %v2532
    %2544 = vmatpush.bf16.msra.mxu0 %v2531
    %2545 = vmatpush.bf16.msra.mxu0 %v2530
    %2546 = vmatpush.bf16.msra.mxu0 %v2529
    %2547 = vmatpush.bf16.msra.mxu0 %v2528
    %2548 = vmatpush.bf16.msra.mxu0 %v2527
    %2549 = vmatpush.bf16.msra.mxu0 %v2526
    %2550 = vmatmul.bf16.gmra.mxu0 %v2473
    %v2551 = vpop.f32.mrf.mxu0
    %v2552 = vadd.f32 %v2492, %v2551
    %v2553 = vpop.f32.mrf.mxu0
    %v2554 = vadd.f32 %v2492, %v2553
    %2555 = vdwg.mxu0
    %v2556 = vmax.f32 %v2552, 0.0
    %v2557 = vmax.f32 %v2554, 0.0
    %v2558 = vpack.c.bf16 %v2557, %v2556
    %v2559 = vld [vmem:[#allocation25] sm:$0xf]
    %v2560 = vld [vmem:[#allocation25 + $0x4] sm:$0xf]
    %v2561 = vld [vmem:[#allocation25 + $0x8] sm:$0xf]
    %v2562 = vld [vmem:[#allocation25 + $0xc] sm:$0xf]
    %v2563 = vld [vmem:[#allocation25 + $0x10] sm:$0xf]
    %v2564 = vld [vmem:[#allocation25 + $0x14] sm:$0xf]
    %v2565 = vld [vmem:[#allocation25 + $0x18] sm:$0xf]
    %v2566 = vld [vmem:[#allocation25 + $0x1c] sm:$0xf]
    %v2567 = vld [vmem:[#allocation25 + $0x20] sm:$0xf]
    %v2568 = vld [vmem:[#allocation25 + $0x24] sm:$0xf]
    %v2569 = vld [vmem:[#allocation25 + $0x28] sm:$0xf]
    %v2570 = vld [vmem:[#allocation25 + $0x2c] sm:$0xf]
    %v2571 = vld [vmem:[#allocation25 + $0x30] sm:$0xf]
    %v2572 = vld [vmem:[#allocation25 + $0x34] sm:$0xf]
    %v2573 = vld [vmem:[#allocation25 + $0x38] sm:$0xf]
    %v2574 = vld [vmem:[#allocation25 + $0x3c] sm:$0xf]
    %v2575 = vld [vmem:[%s25] sm:$0x1]
    %v2577 = vperm.slane %v2575, 0
    %v2595 = vunpack.c.l.b16 %v2559
    %v2596 = vunpack.c.l.b16 %v2560
    %v2597 = vunpack.c.l.b16 %v2561
    %v2598 = vunpack.c.l.b16 %v2562
    %v2599 = vunpack.c.l.b16 %v2563
    %v2600 = vunpack.c.l.b16 %v2564
    %v2601 = vunpack.c.l.b16 %v2565
    %v2602 = vunpack.c.l.b16 %v2566
    %v2603 = vunpack.c.l.b16 %v2567
    %v2604 = vunpack.c.l.b16 %v2568
    %v2605 = vunpack.c.l.b16 %v2569
    %v2606 = vunpack.c.l.b16 %v2570
    %v2607 = vunpack.c.l.b16 %v2571
    %v2608 = vunpack.c.l.b16 %v2572
    %v2609 = vunpack.c.l.b16 %v2573
    %v2610 = vunpack.c.l.b16 %v2574
    %v2611 = vpack.c.b16 %v2596, %v2595
    %v2612 = vpack.c.b16 %v2598, %v2597
    %v2613 = vpack.c.b16 %v2600, %v2599
    %v2614 = vpack.c.b16 %v2602, %v2601
    %v2615 = vpack.c.b16 %v2604, %v2603
    %v2616 = vpack.c.b16 %v2606, %v2605
    %v2617 = vpack.c.b16 %v2608, %v2607
    %v2618 = vpack.c.b16 %v2610, %v2609
    %2627 = vmatpush.bf16.msra.mxu0 %v2618
    %2628 = vmatpush.bf16.msra.mxu0 %v2617
    %2629 = vmatpush.bf16.msra.mxu0 %v2616
    %2630 = vmatpush.bf16.msra.mxu0 %v2615
    %2631 = vmatpush.bf16.msra.mxu0 %v2614
    %2632 = vmatpush.bf16.msra.mxu0 %v2613
    %2633 = vmatpush.bf16.msra.mxu0 %v2612
    %2634 = vmatpush.bf16.msra.mxu0 %v2611
    %2635 = vmatmul.bf16.gmra.mxu0 %v2558
    %v2636 = vpop.f32.mrf.mxu0
    %v2637 = vadd.f32 %v2577, %v2636
    %v2638 = vpop.f32.mrf.mxu0
    %v2639 = vadd.f32 %v2577, %v2638
    %2640 = vdwg.mxu0
    %v2641 = vmax.f32 %v2637, 0.0
    %v2642 = vmax.f32 %v2639, 0.0
    %v2643 = vpack.c.bf16 %v2642, %v2641
    %v2644 = vld [vmem:[%s26] sm:$0xf]
    %v2645 = vld [vmem:[%s26 + $0x4] sm:$0xf]
    %v2646 = vld [vmem:[%s26 + $0x8] sm:$0xf]
    %v2647 = vld [vmem:[%s26 + $0xc] sm:$0xf]
    %v2648 = vld [vmem:[%s26 + $0x10] sm:$0xf]
    %v2649 = vld [vmem:[%s26 + $0x14] sm:$0xf]
    %v2650 = vld [vmem:[%s26 + $0x18] sm:$0xf]
    %v2651 = vld [vmem:[%s26 + $0x1c] sm:$0xf]
    %v2652 = vld [vmem:[%s26 + $0x20] sm:$0xf]
    %v2653 = vld [vmem:[%s26 + $0x24] sm:$0xf]
    %v2654 = vld [vmem:[%s26 + $0x28] sm:$0xf]
    %v2655 = vld [vmem:[%s26 + $0x2c] sm:$0xf]
    %v2656 = vld [vmem:[%s26 + $0x30] sm:$0xf]
    %v2657 = vld [vmem:[%s26 + $0x34] sm:$0xf]
    %v2658 = vld [vmem:[%s26 + $0x38] sm:$0xf]
    %v2659 = vld [vmem:[%s26 + $0x3c] sm:$0xf]
    %v2660 = vld [vmem:[#allocation2] sm:$0x1]
    %v2662 = vperm.slane %v2660, 0
    %v2680 = vunpack.c.l.b16 %v2644
    %v2681 = vunpack.c.l.b16 %v2645
    %v2682 = vunpack.c.l.b16 %v2646
    %v2683 = vunpack.c.l.b16 %v2647
    %v2684 = vunpack.c.l.b16 %v2648
    %v2685 = vunpack.c.l.b16 %v2649
    %v2686 = vunpack.c.l.b16 %v2650
    %v2687 = vunpack.c.l.b16 %v2651
    %v2688 = vunpack.c.l.b16 %v2652
    %v2689 = vunpack.c.l.b16 %v2653
    %v2690 = vunpack.c.l.b16 %v2654
    %v2691 = vunpack.c.l.b16 %v2655
    %v2692 = vunpack.c.l.b16 %v2656
    %v2693 = vunpack.c.l.b16 %v2657
    %v2694 = vunpack.c.l.b16 %v2658
    %v2695 = vunpack.c.l.b16 %v2659
    %v2696 = vpack.c.b16 %v2681, %v2680
    %v2697 = vpack.c.b16 %v2683, %v2682
    %v2698 = vpack.c.b16 %v2685, %v2684
    %v2699 = vpack.c.b16 %v2687, %v2686
    %v2700 = vpack.c.b16 %v2689, %v2688
    %v2701 = vpack.c.b16 %v2691, %v2690
    %v2702 = vpack.c.b16 %v2693, %v2692
    %v2703 = vpack.c.b16 %v2695, %v2694
    %2712 = vmatpush.bf16.msra.mxu0 %v2703
    %2713 = vmatpush.bf16.msra.mxu0 %v2702
    %2714 = vmatpush.bf16.msra.mxu0 %v2701
    %2715 = vmatpush.bf16.msra.mxu0 %v2700
    %2716 = vmatpush.bf16.msra.mxu0 %v2699
    %2717 = vmatpush.bf16.msra.mxu0 %v2698
    %2718 = vmatpush.bf16.msra.mxu0 %v2697
    %2719 = vmatpush.bf16.msra.mxu0 %v2696
    %2720 = vmatmul.bf16.gmra.mxu0 %v2643
    %v2721 = vpop.f32.mrf.mxu0
    %v2722 = vadd.f32 %v2662, %v2721
    %v2723 = vpop.f32.mrf.mxu0
    %v2724 = vadd.f32 %v2662, %v2723
    %2725 = vdwg.mxu0
    %v2726 = vld [vmem:[#allocation11] sm:$0xff]
    %vm2727 = vcmask 130048
    %v2729 = vsel %vm2727, %v2726, 0
    %2731 = vmatpush.msra.mxu0 0.0
    %2732 = vmatpush.msra.mxu0 0.0
    %2733 = vmatpush.msra.mxu0 0.0
    %2734 = vmatpush.msra.mxu0 0.0
    %2735 = vmatpush.msra.mxu0 0.0
    %2736 = vmatpush.msra.mxu0 0.0
    %2737 = vmatpush.msra.mxu0 0.0
    %2738 = vmatpush.msra.mxu0 0.0
    %2739 = vmatpush.msra.mxu0 0.0
    %2740 = vmatpush.msra.mxu0 0.0
    %2741 = vmatpush.msra.mxu0 0.0
    %2742 = vmatpush.msra.mxu0 0.0
    %2743 = vmatpush.msra.mxu0 0.0
    %2744 = vmatpush.msra.mxu0 0.0
    %2745 = vmatpush.msra.mxu0 %v2724
    %2746 = vmatpush.msra.mxu0 %v2722
    %2747 = vmatmul.f32.gmra.mxu0 %v2729
    %v2748 = vpop.f32.mrf.mxu0
    %v2749 = vadd.f32 0.0, %v2748
    %2750 = vdwg.mxu0
    %vm2751 = vcmask 7168
    %2752 = vst.msk [vmem:[%s28] sm:$0xff] %vm2751, %v2749
    // Predicated region
    $region181: #{tpu_custom_call.1} parent=1 // pred_check
      _
    $region182: #{tpu_custom_call.1} parent=1 // pred_check_branch
      %2754 = sbr.rel (0) target = $region184
    $region183: #{tpu_custom_call.1} parent=1 // pred_region
      _
    $region184: #{tpu_custom_call.1} parent=1 // pred_fallthru
      _
    // Predicated region
    $region185: #{tpu_custom_call.1} parent=1 // pred_check
      _
    $region186: #{tpu_custom_call.1} parent=1 // pred_check_branch
      %2756 = sbr.rel (0) target = $region188
    $region187: #{tpu_custom_call.1} parent=1 // pred_region
      _
    $region188: #{tpu_custom_call.1} parent=1 // pred_fallthru
      _
    %2757 = vsyncpa [#allocation4], 1
    %2758 = vsyncpa [#allocation6], 1
    %2759 = vsyncpa [#allocation9], 1
    %2760 = vsyncpa [#allocation12], 1
    %2761 = vsyncpa [#allocation15], 1
    %2762 = vsyncpa [#allocation18], 1
    %2763 = vsyncpa [#allocation21], 1
    %2764 = vsyncpa [#allocation24], 1

</llo_original>
